<compile_context>
chip_gen: v7x
topology: tpu7x:2x2x1
jax: 0.10.0
libtpu: 0.0.40
codegen_flags: <defaults>
</compile_context>

<pallas_src>
import functools
import math

import jax
import jax.numpy as jnp
from jax.experimental import pallas as pl
from jax.experimental.pallas import tpu as pltpu

DIM = 128  # resnet50_128 embedding dim


# ---------------------------------------------------------------------------
# Stage 1: K-tiled backbone matmul -> per-member L2-normalize -> sum over m.
# ---------------------------------------------------------------------------
def _feat_sum_kernel(x_ref, w_ref, s_ref, acc_ref, *, m):
    k = pl.program_id(1)

    @pl.when(k == 0)
    def _init():
        acc_ref[...] = jnp.zeros_like(acc_ref)

    # f32 x f32 -> f32 accumulate on the MXU (kernel is HBM-bound; keeping f32
    # operands avoids bf16-induced sign flips in the final sign() code).
    acc_ref[...] += jnp.dot(
        x_ref[...], w_ref[...], preferred_element_type=jnp.float32
    )

    @pl.when(k == pl.num_programs(1) - 1)
    def _finalize():
        feats = acc_ref[...]                       # (tn, D) == base_model output slice
        tn = feats.shape[0]
        x = feats.reshape(tn // m, m, DIM)         # (B_tile, m, D)

        # F.normalize(x, p=2, dim=1): per (b, member) L2 norm over the D channels.
        # x / max(||x||, 1e-12)  ==  x * rsqrt(max(||x||^2, 1e-24))
        sumsq = jnp.sum(x * x, axis=-1, keepdims=True)
        x_n = x * jax.lax.rsqrt(jnp.maximum(sumsq, 1e-24))

        # torch.sum(x, dim=2).squeeze(): sum over the m set members -> (B_tile, D)
        s_ref[...] = jnp.sum(x_n, axis=1)


# ---------------------------------------------------------------------------
# Stage 2: BatchNorm1d (training mode) -> L2-normalize -> sign.
# ---------------------------------------------------------------------------
def _head_kernel(s_ref, gamma_ref, beta_ref, v_ref, code_ref):
    s = s_ref[...]                                 # (B, D)

    # nn.BatchNorm1d(D), training mode: batch mean / biased var, eps=1e-5.
    mu = jnp.mean(s, axis=0, keepdims=True)
    var = jnp.mean((s - mu) ** 2, axis=0, keepdims=True)
    y = (s - mu) * jax.lax.rsqrt(var + 1e-5) * gamma_ref[...] + beta_ref[...]

    # F.normalize(set_vec, p=2, dim=1)
    r2 = jnp.sum(y * y, axis=-1, keepdims=True)
    v = y * jax.lax.rsqrt(jnp.maximum(r2, 1e-24))

    v_ref[...] = v
    # Matches the module exactly: torch.sign(v_set + 1e-16).
    code_ref[...] = jnp.sign(v + 1e-16)


# ---------------------------------------------------------------------------
# Generation-aware tiling helpers.
# ---------------------------------------------------------------------------
def _vmem_budget_bytes():
    """Scoped VMEM limit: ~75% of physical capacity (64 MiB v7x, 128 MiB v5e/v6e)."""
    cap = 64 * 1024 * 1024  # conservative fallback (v7x-safe)
    try:
        info = pltpu.get_tpu_info()
        cap = int(getattr(info, "vmem_capacity_bytes", cap)) or cap
    except Exception:
        pass
    return min(int(0.75 * cap), 100 * 1024 * 1024)


def _pick_tn(N, m, target=512):
    """N tile: multiple of 8*m (sublane-aligned x block and output block) dividing N."""
    if N <= max(target, 8 * m):
        return N
    base = 8 * m
    t = (target // base) * base
    while t >= base:
        if N % t == 0:
            return t
        t -= base
    return N  # fall back: single N tile (still correct)


def _pick_tk(F, tn, m, budget):
    """K tile sized so double-buffered f32 x/w tiles + accumulator fit the budget."""
    tile_budget = int(0.8 * budget)
    fixed = tn * DIM * 4 + 2 * (tn // m) * DIM * 4      # acc scratch + out buffers
    per_tk = 8 * (tn + DIM)                             # 2 bufs * 4 B * (tn + DIM)
    avail = max(tile_budget - fixed, per_tk * 512)
    tk_max = min(avail // per_tk, 8192)
    if tk_max >= F:
        return F                                        # single K step, no padding
    tk_max = max(tk_max, 512)
    if F % 128 == 0:
        # Prefer a lane-aligned tk that divides F exactly (avoids padding x).
        t = (tk_max // 128) * 128
        while t >= 512:
            if F % t == 0:
                return t
            t -= 128
    return max((tk_max // 512) * 512, 512)              # will require padding


# ---------------------------------------------------------------------------
# Full forward:  Baseline(x, m) -> (v_set, code_set)
# ---------------------------------------------------------------------------
def baseline_forward(x_nchw, m, w_proj, gamma, beta):
    N = x_nchw.shape[0]
    assert N % m == 0, "batch must be divisible by set size m"
    B = N // m

    x_flat = x_nchw.reshape(N, -1).astype(jnp.float32)
    w_proj = w_proj.astype(jnp.float32)
    F = x_flat.shape[1]

    budget = _vmem_budget_bytes()
    tn = _pick_tn(N, m)
    tk = _pick_tk(F, tn, m, budget)

    if F % tk != 0:
        # Zero-pad BOTH x and w along F so the last K block stays exact.
        F_pad = pl.cdiv(F, tk) * tk
        x_flat = jnp.pad(x_flat, ((0, 0), (0, F_pad - F)))
        w_proj = jnp.pad(w_proj, ((0, F_pad - F), (0, 0)))
        F = F_pad

    n_n = N // tn
    n_k = F // tk

    # ---- Stage 1: features + per-member normalize + sum over m -------------
    s = pl.pallas_call(
        functools.partial(_feat_sum_kernel, m=m),
        out_shape=jax.ShapeDtypeStruct((B, DIM), jnp.float32),
        grid=(n_n, n_k),
        in_specs=[
            pl.BlockSpec((tn, tk), lambda i, k: (i, k)),     # activations tile
            pl.BlockSpec((tk, DIM), lambda i, k: (k, 0)),    # weight K-slice
        ],
        out_specs=pl.BlockSpec((tn // m, DIM), lambda i, k: (i, 0)),
        scratch_shapes=[pltpu.VMEM((tn, DIM), jnp.float32)],
        compiler_params=pltpu.CompilerParams(
            dimension_semantics=("parallel", "arbitrary"),   # N parallel, K reduce
            vmem_limit_bytes=budget,
        ),
        cost_estimate=pl.CostEstimate(
            flops=2 * N * F * DIM,
            transcendentals=N,
            bytes_accessed=x_flat.size * 4 + w_proj.size * 4 + B * DIM * 4,
        ),
    )(x_flat, w_proj)

    # ---- Stage 2: BatchNorm1d + L2-normalize + sign (tiny) ------------------
    v_set, code_set = pl.pallas_call(
        _head_kernel,
        out_shape=(
            jax.ShapeDtypeStruct((B, DIM), jnp.float32),
            jax.ShapeDtypeStruct((B, DIM), jnp.float32),
        ),
        grid=(1,),
        in_specs=[
            pl.BlockSpec((B, DIM), lambda i: (0, 0)),
            pl.BlockSpec((1, DIM), lambda i: (0, 0)),
            pl.BlockSpec((1, DIM), lambda i: (0, 0)),
        ],
        out_specs=(
            pl.BlockSpec((B, DIM), lambda i: (0, 0)),
            pl.BlockSpec((B, DIM), lambda i: (0, 0)),
        ),
        compiler_params=pltpu.CompilerParams(
            dimension_semantics=("arbitrary",),
        ),
    )(s, gamma, beta)

    return v_set, code_set


# ---------------------------------------------------------------------------
# Pure-JAX reference (for a sanity check of the fused kernels).
# ---------------------------------------------------------------------------
def _reference(x_nchw, m, w_proj, gamma, beta):
    N = x_nchw.shape[0]
    B = N // m
    feats = x_nchw.reshape(N, -1).astype(jnp.float32) @ w_proj.astype(jnp.float32)
    x = feats.reshape(B, m, DIM)
    x = x * jax.lax.rsqrt(jnp.maximum(jnp.sum(x * x, -1, keepdims=True), 1e-24))
    s = jnp.sum(x, axis=1)
    mu = jnp.mean(s, 0, keepdims=True)
    var = jnp.mean((s - mu) ** 2, 0, keepdims=True)
    y = (s - mu) * jax.lax.rsqrt(var + 1e-5) * gamma + beta
    v = y * jax.lax.rsqrt(jnp.maximum(jnp.sum(y * y, -1, keepdims=True), 1e-24))
    return v, jnp.sign(v + 1e-16)


if __name__ == "__main__":
    key = jax.random.PRNGKey(0)
    k_x, k_w = jax.random.split(key)

    # Small shapes consistent with the forward: N = B*m images, NCHW.
    B, m, C, H, W = 2, 4, 3, 32, 32
    N = B * m
    x = jax.random.normal(k_x, (N, C, H, W), dtype=jnp.float32)

    # Deterministic stand-in backbone projection + fresh-BatchNorm1d params.
    Fdim = C * H * W
    w_proj = (
        jax.random.normal(k_w, (Fdim, DIM), dtype=jnp.float32)
        / jnp.sqrt(jnp.float32(Fdim))
    )
    gamma = jnp.ones((1, DIM), dtype=jnp.float32)   # BatchNorm1d weight init
    beta = jnp.zeros((1, DIM), dtype=jnp.float32)   # BatchNorm1d bias init

    v_set, code_set = baseline_forward(x, m, w_proj, gamma, beta)
    jax.block_until_ready((v_set, code_set))

    assert v_set.shape == (B, DIM) and code_set.shape == (B, DIM)
    assert bool(jnp.all(jnp.isfinite(v_set)))

    v_ref, _ = _reference(x, m, w_proj, gamma, beta)
    assert bool(jnp.max(jnp.abs(v_set - v_ref)) < 1e-2), "mismatch vs reference"

    print("KERNEL_OK")
</pallas_src>

<mosaic_0001>
module attributes {stable_mosaic.version = 11 : i64} {
  func.func @_feat_sum_kernel(%arg0: i32, %arg1: i32, %arg2: memref<8x3072xf32, #tpu.memory_space<vmem>>, %arg3: memref<3072x128xf32, #tpu.memory_space<vmem>>, %arg4: memref<2x128xf32, #tpu.memory_space<vmem>>, %arg5: memref<8x128xf32, #tpu.memory_space<vmem>>) attributes {dimension_semantics = [#tpu.dimension_semantics<parallel>, #tpu.dimension_semantics<arbitrary>], iteration_bounds = array<i64: 1, 1>, scalar_prefetch = 0 : i64, scratch_operands = 1 : i64, tpu.core_type = #tpu.core_type<tc>, window_params = [{transform_indices = @transform_0, window_bounds = array<i64: 8, 3072>}, {transform_indices = @transform_1, window_bounds = array<i64: 3072, 128>}, {transform_indices = @transform_2, window_bounds = array<i64: 2, 128>}]} {
    %c0_i32 = arith.constant 0 : i32
    %0 = arith.cmpi eq, %arg1, %c0_i32 : i32
    %1 = arith.extui %0 : i1 to i32
    %c0_i32_0 = arith.constant 0 : i32
    %2 = arith.cmpi ne, %1, %c0_i32_0 : i32
    scf.if %2 {
      %cst_10 = arith.constant 0.000000e+00 : f32
      %12 = vector.broadcast %cst_10 : f32 to vector<8x128xf32>
      %c0_11 = arith.constant 0 : index
      %c0_12 = arith.constant 0 : index
      %13 = vector.load %arg5[%c0_11, %c0_12] : memref<8x128xf32, #tpu.memory_space<vmem>>, vector<8x128xf32>
      tpu.vector_store %arg5[%c0_11, %c0_12], %12 {strides = array<i32>} : memref<8x128xf32, #tpu.memory_space<vmem>>, vector<8x128xf32>,
    } else {
    }
    %c0 = arith.constant 0 : index
    %c0_1 = arith.constant 0 : index
    %3 = vector.load %arg5[%c0, %c0_1] : memref<8x128xf32, #tpu.memory_space<vmem>>, vector<8x128xf32>
    %c0_2 = arith.constant 0 : index
    %c0_3 = arith.constant 0 : index
    %4 = vector.load %arg2[%c0_2, %c0_3] : memref<8x3072xf32, #tpu.memory_space<vmem>>, vector<8x3072xf32>
    %c0_4 = arith.constant 0 : index
    %c0_5 = arith.constant 0 : index
    %5 = vector.load %arg3[%c0_4, %c0_5] : memref<3072x128xf32, #tpu.memory_space<vmem>>, vector<3072x128xf32>
    %cst = arith.constant dense<0.000000e+00> : vector<8x128xf32>
    %6 = tpu.matmul %4, %5, %cst {dimension_numbers = #tpu.dot_dimension_numbers<[1], [0], [0], [1], [0, 0, 1, 1], [], []>} : vector<8x3072xf32>, vector<3072x128xf32>, vector<8x128xf32> -> vector<8x128xf32>
    %7 = arith.addf %3, %6 : vector<8x128xf32>
    %c0_6 = arith.constant 0 : index
    %c0_7 = arith.constant 0 : index
    %8 = vector.load %arg5[%c0_6, %c0_7] : memref<8x128xf32, #tpu.memory_space<vmem>>, vector<8x128xf32>
    tpu.vector_store %arg5[%c0_6, %c0_7], %7 {strides = array<i32>} : memref<8x128xf32, #tpu.memory_space<vmem>>, vector<8x128xf32>,
    %c0_i32_8 = arith.constant 0 : i32
    %9 = arith.cmpi eq, %arg1, %c0_i32_8 : i32
    %10 = arith.extui %9 : i1 to i32
    %c0_i32_9 = arith.constant 0 : i32
    %11 = arith.cmpi ne, %10, %c0_i32_9 : i32
    scf.if %11 {
      %c0_10 = arith.constant 0 : index
      %c0_11 = arith.constant 0 : index
      %12 = vector.load %arg5[%c0_10, %c0_11] : memref<8x128xf32, #tpu.memory_space<vmem>>, vector<8x128xf32>
      %13 = vector.shape_cast %12 : vector<8x128xf32> to vector<2x4x128xf32>
      %14 = arith.mulf %13, %13 : vector<2x4x128xf32>
      %cst_12 = arith.constant dense<0.000000e+00> : vector<2x4xf32>
      %15 = vector.multi_reduction <add>, %14, %cst_12 [2] : vector<2x4x128xf32> to vector<2x4xf32>
      %16 = vector.shape_cast %15 : vector<2x4xf32> to vector<2x4x1xf32>
      %cst_13 = arith.constant 1.000000e-24 : f32
      %17 = vector.broadcast %cst_13 : f32 to vector<2x4x1xf32>
      %18 = arith.maximumf %16, %17 : vector<2x4x1xf32>
      %19 = math.rsqrt %18 : vector<2x4x1xf32>
      %20 = vector.broadcast %19 : vector<2x4x1xf32> to vector<2x4x128xf32>
      %21 = arith.mulf %13, %20 : vector<2x4x128xf32>
      %cst_14 = arith.constant dense<0.000000e+00> : vector<2x128xf32>
      %22 = vector.multi_reduction <add>, %21, %cst_14 [1] : vector<2x4x128xf32> to vector<2x128xf32>
      %c0_15 = arith.constant 0 : index
      %c0_16 = arith.constant 0 : index
      %23 = vector.load %arg4[%c0_15, %c0_16] : memref<2x128xf32, #tpu.memory_space<vmem>>, vector<2x128xf32>
      tpu.vector_store %arg4[%c0_15, %c0_16], %22 {strides = array<i32>} : memref<2x128xf32, #tpu.memory_space<vmem>>, vector<2x128xf32>,
    } else {
    }
    return
  }
  func.func @transform_0(%arg0: i32, %arg1: i32) -> (i32, i32) {
    %c0_i32 = arith.constant 0 : i32
    return %arg0, %arg1 : i32, i32
  }
  func.func @transform_1(%arg0: i32, %arg1: i32) -> (i32, i32) {
    %c0_i32 = arith.constant 0 : i32
    %c0_i32_0 = arith.constant 0 : i32
    return %arg1, %c0_i32 : i32, i32
  }
  func.func @transform_2(%arg0: i32, %arg1: i32) -> (i32, i32) {
    %c0_i32 = arith.constant 0 : i32
    %c0_i32_0 = arith.constant 0 : i32
    return %arg0, %c0_i32 : i32, i32
  }
}

</mosaic_0001>

<llo_original>
// kernel: tpu_custom_call.1
$region0: #{tpu_custom_call.1}
  #allocation0 [shape = 'u32[]', space=smem, size = 0x4, offset = 0x4, fixed_abs, tag = 'smem constant byte address 0x4 - core index']
  #allocation1 [shape = 'u32[144,128]{1,0:T(1,128)}', space=vmem, size = 0x12000, scoped, tag = 'internal scratch']
  #allocation2 [shape = 'f32[8,128]{1,0:T(8,128)}', space=vmem, size = 0x1000, scoped, tag = 'scratch operand']
  %s0 = inlined_call_operand.hbm [shape: f32[8,3072], index: 0, kind: input, shape index: {}]
  %s1 = inlined_call_operand.hbm [shape: f32[3072,128], index: 1, kind: input, shape index: {}]
  %s2 = inlined_call_operand.hbm [shape: f32[2,128], index: 2, kind: output, shape index: {}]
  %s3 = sld [smem:[#allocation0]]
  $region34: #{tpu_custom_call.1} parent=0
    _
  %s5 = ssub.s32 1, %s3
  %s6 = scalar_select 0, %s5, %s3
  $region1: #{tpu_custom_call.1} parent=0
    #allocation3 [shape = 'u8[98304]{0}', space=vmem, size = 0x18000, scoped, tag = 'input window, operand 0, single buffered']
    #allocation4 [shape = 's32[1]{0}', space=sflag, size = 0x4, scoped, tag = 'scoped memory for tpu_custom_call.1']
    #allocation5 [shape = 's32[1]{0}', space=sflag, size = 0x4, scoped, tag = 'scoped memory for tpu_custom_call.1']
    #allocation6 [shape = 'u8[1572864]{0}', space=vmem, size = 0x180000, scoped, tag = 'input window, operand 1, single buffered']
    #allocation7 [shape = 's32[1]{0}', space=sflag, size = 0x4, scoped, tag = 'scoped memory for tpu_custom_call.1']
    #allocation8 [shape = 'u8[1024]{0}', space=vmem, size = 0x400, scoped, tag = 'output window, operand 0, single buffered']
    %7 = vsyncpa [#allocation4], 0
    %8 = vsyncpa [#allocation7], 0
    %9 = vsyncpa [#allocation5], 0
    // Predicated region
    $region2: #{tpu_custom_call.1} parent=1 // pred_check
      _
    $region3: #{tpu_custom_call.1} parent=1 // pred_check_branch
      %11 = sbr.rel (0) target = $region5
    $region4: #{tpu_custom_call.1} parent=1 // pred_region
      %s13 = ssub.s32 3072, 3072
      %14 = vsyncadd [#allocation4], %s13
      %s16 = sshll.u32 [#allocation3], 4
      %s17 = int_to_ptr.vmem [resolvable:$true] %s16
      %19 = dma.hbm_to_vmem [thread:$0]  %s0, 3072, %s17, [#allocation4]
    $region5: #{tpu_custom_call.1} parent=1 // pred_fallthru
      _
    // Predicated region
    $region6: #{tpu_custom_call.1} parent=1 // pred_check
      _
    $region7: #{tpu_custom_call.1} parent=1 // pred_check_branch
      %21 = sbr.rel (0) target = $region9
    $region8: #{tpu_custom_call.1} parent=1 // pred_region
      %s23 = ssub.s32 49152, 49152
      %24 = vsyncadd [#allocation7], %s23
      %s25 = sshll.u32 [#allocation6], 4
      %s26 = int_to_ptr.vmem [resolvable:$true] %s25
      %31 = dma.hbm_to_vmem [thread:$0]  %s1, 49152, %s26, [#allocation7], 128, 128, 8
    $region9: #{tpu_custom_call.1} parent=1 // pred_fallthru
      _
    // Predicated region
    $region10: #{tpu_custom_call.1} parent=1 // pred_check
      _
    $region11: #{tpu_custom_call.1} parent=1 // pred_check_branch
      %33 = sbr.rel (0) target = $region13
    $region12: #{tpu_custom_call.1} parent=1 // pred_region
      %34 = dma.done [#allocation4], 3072
    $region13: #{tpu_custom_call.1} parent=1 // pred_fallthru
      _
    // Predicated region
    $region14: #{tpu_custom_call.1} parent=1 // pred_check
      _
    $region15: #{tpu_custom_call.1} parent=1 // pred_check_branch
      %36 = sbr.rel (0) target = $region17
    $region16: #{tpu_custom_call.1} parent=1 // pred_region
      %37 = dma.done [#allocation7], 49152
    $region17: #{tpu_custom_call.1} parent=1 // pred_fallthru
      _
    %p38 = scmp.eq.s32.totalorder 0, 0
    // Predicated region
    $region18: #{tpu_custom_call.1} parent=1 // pred_check
      %p39 = pneg %p38
    $region19: #{tpu_custom_call.1} parent=1 // pred_check_branch
      %41 = sbr.rel (%p39) target = $region21
    $region20: #{tpu_custom_call.1} parent=1 // pred_region
      %42 = vst [vmem:[#allocation2] sm:$0xff] 0.0
    $region21: #{tpu_custom_call.1} parent=1 // pred_fallthru
      _
    %v43 = vld [vmem:[#allocation2] sm:$0xff]
    %v44 = vld [vmem:[#allocation3] sm:$0xff]
    %v45 = vld [vmem:[#allocation3 + $0x8] sm:$0xff]
    %v46 = vld [vmem:[#allocation3 + $0x10] sm:$0xff]
    %v47 = vld [vmem:[#allocation3 + $0x18] sm:$0xff]
    %v48 = vld [vmem:[#allocation3 + $0x20] sm:$0xff]
    %v49 = vld [vmem:[#allocation3 + $0x28] sm:$0xff]
    %v50 = vld [vmem:[#allocation3 + $0x30] sm:$0xff]
    %v51 = vld [vmem:[#allocation3 + $0x38] sm:$0xff]
    %v52 = vld [vmem:[#allocation3 + $0x40] sm:$0xff]
    %v53 = vld [vmem:[#allocation3 + $0x48] sm:$0xff]
    %v54 = vld [vmem:[#allocation3 + $0x50] sm:$0xff]
    %v55 = vld [vmem:[#allocation3 + $0x58] sm:$0xff]
    %v56 = vld [vmem:[#allocation3 + $0x60] sm:$0xff]
    %v57 = vld [vmem:[#allocation3 + $0x68] sm:$0xff]
    %v58 = vld [vmem:[#allocation3 + $0x70] sm:$0xff]
    %v59 = vld [vmem:[#allocation3 + $0x78] sm:$0xff]
    %v60 = vld [vmem:[#allocation3 + $0x80] sm:$0xff]
    %v61 = vld [vmem:[#allocation3 + $0x88] sm:$0xff]
    %v62 = vld [vmem:[#allocation3 + $0x90] sm:$0xff]
    %v63 = vld [vmem:[#allocation3 + $0x98] sm:$0xff]
    %v64 = vld [vmem:[#allocation3 + $0xa0] sm:$0xff]
    %v65 = vld [vmem:[#allocation3 + $0xa8] sm:$0xff]
    %v66 = vld [vmem:[#allocation3 + $0xb0] sm:$0xff]
    %v67 = vld [vmem:[#allocation3 + $0xb8] sm:$0xff]
    %v68 = vld [vmem:[#allocation6] sm:$0xff]
    %v69 = vld [vmem:[#allocation6 + $0x8] sm:$0xff]
    %v70 = vld [vmem:[#allocation6 + $0x10] sm:$0xff]
    %v71 = vld [vmem:[#allocation6 + $0x18] sm:$0xff]
    %v72 = vld [vmem:[#allocation6 + $0x20] sm:$0xff]
    %v73 = vld [vmem:[#allocation6 + $0x28] sm:$0xff]
    %v74 = vld [vmem:[#allocation6 + $0x30] sm:$0xff]
    %v75 = vld [vmem:[#allocation6 + $0x38] sm:$0xff]
    %v76 = vld [vmem:[#allocation6 + $0x40] sm:$0xff]
    %v77 = vld [vmem:[#allocation6 + $0x48] sm:$0xff]
    %v78 = vld [vmem:[#allocation6 + $0x50] sm:$0xff]
    %v79 = vld [vmem:[#allocation6 + $0x58] sm:$0xff]
    %v80 = vld [vmem:[#allocation6 + $0x60] sm:$0xff]
    %v81 = vld [vmem:[#allocation6 + $0x68] sm:$0xff]
    %v82 = vld [vmem:[#allocation6 + $0x70] sm:$0xff]
    %v83 = vld [vmem:[#allocation6 + $0x78] sm:$0xff]
    %v84 = vld [vmem:[#allocation6 + $0x80] sm:$0xff]
    %v85 = vld [vmem:[#allocation6 + $0x88] sm:$0xff]
    %v86 = vld [vmem:[#allocation6 + $0x90] sm:$0xff]
    %v87 = vld [vmem:[#allocation6 + $0x98] sm:$0xff]
    %v88 = vld [vmem:[#allocation6 + $0xa0] sm:$0xff]
    %v89 = vld [vmem:[#allocation6 + $0xa8] sm:$0xff]
    %v90 = vld [vmem:[#allocation6 + $0xb0] sm:$0xff]
    %v91 = vld [vmem:[#allocation6 + $0xb8] sm:$0xff]
    %v92 = vld [vmem:[#allocation6 + $0xc0] sm:$0xff]
    %v93 = vld [vmem:[#allocation6 + $0xc8] sm:$0xff]
    %v94 = vld [vmem:[#allocation6 + $0xd0] sm:$0xff]
    %v95 = vld [vmem:[#allocation6 + $0xd8] sm:$0xff]
    %v96 = vld [vmem:[#allocation6 + $0xe0] sm:$0xff]
    %v97 = vld [vmem:[#allocation6 + $0xe8] sm:$0xff]
    %v98 = vld [vmem:[#allocation6 + $0xf0] sm:$0xff]
    %v99 = vld [vmem:[#allocation6 + $0xf8] sm:$0xff]
    %v100 = vld [vmem:[#allocation6 + $0x100] sm:$0xff]
    %v101 = vld [vmem:[#allocation6 + $0x108] sm:$0xff]
    %v102 = vld [vmem:[#allocation6 + $0x110] sm:$0xff]
    %v103 = vld [vmem:[#allocation6 + $0x118] sm:$0xff]
    %v104 = vld [vmem:[#allocation6 + $0x120] sm:$0xff]
    %v105 = vld [vmem:[#allocation6 + $0x128] sm:$0xff]
    %v106 = vld [vmem:[#allocation6 + $0x130] sm:$0xff]
    %v107 = vld [vmem:[#allocation6 + $0x138] sm:$0xff]
    %v108 = vld [vmem:[#allocation6 + $0x140] sm:$0xff]
    %v109 = vld [vmem:[#allocation6 + $0x148] sm:$0xff]
    %v110 = vld [vmem:[#allocation6 + $0x150] sm:$0xff]
    %v111 = vld [vmem:[#allocation6 + $0x158] sm:$0xff]
    %v112 = vld [vmem:[#allocation6 + $0x160] sm:$0xff]
    %v113 = vld [vmem:[#allocation6 + $0x168] sm:$0xff]
    %v114 = vld [vmem:[#allocation6 + $0x170] sm:$0xff]
    %v115 = vld [vmem:[#allocation6 + $0x178] sm:$0xff]
    %v116 = vld [vmem:[#allocation6 + $0x180] sm:$0xff]
    %v117 = vld [vmem:[#allocation6 + $0x188] sm:$0xff]
    %v118 = vld [vmem:[#allocation6 + $0x190] sm:$0xff]
    %v119 = vld [vmem:[#allocation6 + $0x198] sm:$0xff]
    %v120 = vld [vmem:[#allocation6 + $0x1a0] sm:$0xff]
    %v121 = vld [vmem:[#allocation6 + $0x1a8] sm:$0xff]
    %v122 = vld [vmem:[#allocation6 + $0x1b0] sm:$0xff]
    %v123 = vld [vmem:[#allocation6 + $0x1b8] sm:$0xff]
    %v124 = vld [vmem:[#allocation6 + $0x1c0] sm:$0xff]
    %v125 = vld [vmem:[#allocation6 + $0x1c8] sm:$0xff]
    %v126 = vld [vmem:[#allocation6 + $0x1d0] sm:$0xff]
    %v127 = vld [vmem:[#allocation6 + $0x1d8] sm:$0xff]
    %v128 = vld [vmem:[#allocation6 + $0x1e0] sm:$0xff]
    %v129 = vld [vmem:[#allocation6 + $0x1e8] sm:$0xff]
    %v130 = vld [vmem:[#allocation6 + $0x1f0] sm:$0xff]
    %v131 = vld [vmem:[#allocation6 + $0x1f8] sm:$0xff]
    %v132 = vld [vmem:[#allocation6 + $0x200] sm:$0xff]
    %v133 = vld [vmem:[#allocation6 + $0x208] sm:$0xff]
    %v134 = vld [vmem:[#allocation6 + $0x210] sm:$0xff]
    %v135 = vld [vmem:[#allocation6 + $0x218] sm:$0xff]
    %v136 = vld [vmem:[#allocation6 + $0x220] sm:$0xff]
    %v137 = vld [vmem:[#allocation6 + $0x228] sm:$0xff]
    %v138 = vld [vmem:[#allocation6 + $0x230] sm:$0xff]
    %v139 = vld [vmem:[#allocation6 + $0x238] sm:$0xff]
    %v140 = vld [vmem:[#allocation6 + $0x240] sm:$0xff]
    %v141 = vld [vmem:[#allocation6 + $0x248] sm:$0xff]
    %v142 = vld [vmem:[#allocation6 + $0x250] sm:$0xff]
    %v143 = vld [vmem:[#allocation6 + $0x258] sm:$0xff]
    %v144 = vld [vmem:[#allocation6 + $0x260] sm:$0xff]
    %v145 = vld [vmem:[#allocation6 + $0x268] sm:$0xff]
    %v146 = vld [vmem:[#allocation6 + $0x270] sm:$0xff]
    %v147 = vld [vmem:[#allocation6 + $0x278] sm:$0xff]
    %v148 = vld [vmem:[#allocation6 + $0x280] sm:$0xff]
    %v149 = vld [vmem:[#allocation6 + $0x288] sm:$0xff]
    %v150 = vld [vmem:[#allocation6 + $0x290] sm:$0xff]
    %v151 = vld [vmem:[#allocation6 + $0x298] sm:$0xff]
    %v152 = vld [vmem:[#allocation6 + $0x2a0] sm:$0xff]
    %v153 = vld [vmem:[#allocation6 + $0x2a8] sm:$0xff]
    %v154 = vld [vmem:[#allocation6 + $0x2b0] sm:$0xff]
    %v155 = vld [vmem:[#allocation6 + $0x2b8] sm:$0xff]
    %v156 = vld [vmem:[#allocation6 + $0x2c0] sm:$0xff]
    %v157 = vld [vmem:[#allocation6 + $0x2c8] sm:$0xff]
    %v158 = vld [vmem:[#allocation6 + $0x2d0] sm:$0xff]
    %v159 = vld [vmem:[#allocation6 + $0x2d8] sm:$0xff]
    %v160 = vld [vmem:[#allocation6 + $0x2e0] sm:$0xff]
    %v161 = vld [vmem:[#allocation6 + $0x2e8] sm:$0xff]
    %v162 = vld [vmem:[#allocation6 + $0x2f0] sm:$0xff]
    %v163 = vld [vmem:[#allocation6 + $0x2f8] sm:$0xff]
    %v164 = vld [vmem:[#allocation6 + $0x300] sm:$0xff]
    %v165 = vld [vmem:[#allocation6 + $0x308] sm:$0xff]
    %v166 = vld [vmem:[#allocation6 + $0x310] sm:$0xff]
    %v167 = vld [vmem:[#allocation6 + $0x318] sm:$0xff]
    %v168 = vld [vmem:[#allocation6 + $0x320] sm:$0xff]
    %v169 = vld [vmem:[#allocation6 + $0x328] sm:$0xff]
    %v170 = vld [vmem:[#allocation6 + $0x330] sm:$0xff]
    %v171 = vld [vmem:[#allocation6 + $0x338] sm:$0xff]
    %v172 = vld [vmem:[#allocation6 + $0x340] sm:$0xff]
    %v173 = vld [vmem:[#allocation6 + $0x348] sm:$0xff]
    %v174 = vld [vmem:[#allocation6 + $0x350] sm:$0xff]
    %v175 = vld [vmem:[#allocation6 + $0x358] sm:$0xff]
    %v176 = vld [vmem:[#allocation6 + $0x360] sm:$0xff]
    %v177 = vld [vmem:[#allocation6 + $0x368] sm:$0xff]
    %v178 = vld [vmem:[#allocation6 + $0x370] sm:$0xff]
    %v179 = vld [vmem:[#allocation6 + $0x378] sm:$0xff]
    %v180 = vld [vmem:[#allocation6 + $0x380] sm:$0xff]
    %v181 = vld [vmem:[#allocation6 + $0x388] sm:$0xff]
    %v182 = vld [vmem:[#allocation6 + $0x390] sm:$0xff]
    %v183 = vld [vmem:[#allocation6 + $0x398] sm:$0xff]
    %v184 = vld [vmem:[#allocation6 + $0x3a0] sm:$0xff]
    %v185 = vld [vmem:[#allocation6 + $0x3a8] sm:$0xff]
    %v186 = vld [vmem:[#allocation6 + $0x3b0] sm:$0xff]
    %v187 = vld [vmem:[#allocation6 + $0x3b8] sm:$0xff]
    %v188 = vld [vmem:[#allocation6 + $0x3c0] sm:$0xff]
    %v189 = vld [vmem:[#allocation6 + $0x3c8] sm:$0xff]
    %v190 = vld [vmem:[#allocation6 + $0x3d0] sm:$0xff]
    %v191 = vld [vmem:[#allocation6 + $0x3d8] sm:$0xff]
    %v192 = vld [vmem:[#allocation6 + $0x3e0] sm:$0xff]
    %v193 = vld [vmem:[#allocation6 + $0x3e8] sm:$0xff]
    %v194 = vld [vmem:[#allocation6 + $0x3f0] sm:$0xff]
    %v195 = vld [vmem:[#allocation6 + $0x3f8] sm:$0xff]
    %v196 = vld [vmem:[#allocation6 + $0x400] sm:$0xff]
    %v197 = vld [vmem:[#allocation6 + $0x408] sm:$0xff]
    %v198 = vld [vmem:[#allocation6 + $0x410] sm:$0xff]
    %v199 = vld [vmem:[#allocation6 + $0x418] sm:$0xff]
    %v200 = vld [vmem:[#allocation6 + $0x420] sm:$0xff]
    %v201 = vld [vmem:[#allocation6 + $0x428] sm:$0xff]
    %v202 = vld [vmem:[#allocation6 + $0x430] sm:$0xff]
    %v203 = vld [vmem:[#allocation6 + $0x438] sm:$0xff]
    %v204 = vld [vmem:[#allocation6 + $0x440] sm:$0xff]
    %v205 = vld [vmem:[#allocation6 + $0x448] sm:$0xff]
    %v206 = vld [vmem:[#allocation6 + $0x450] sm:$0xff]
    %v207 = vld [vmem:[#allocation6 + $0x458] sm:$0xff]
    %v208 = vld [vmem:[#allocation6 + $0x460] sm:$0xff]
    %v209 = vld [vmem:[#allocation6 + $0x468] sm:$0xff]
    %v210 = vld [vmem:[#allocation6 + $0x470] sm:$0xff]
    %v211 = vld [vmem:[#allocation6 + $0x478] sm:$0xff]
    %v212 = vld [vmem:[#allocation6 + $0x480] sm:$0xff]
    %v213 = vld [vmem:[#allocation6 + $0x488] sm:$0xff]
    %v214 = vld [vmem:[#allocation6 + $0x490] sm:$0xff]
    %v215 = vld [vmem:[#allocation6 + $0x498] sm:$0xff]
    %v216 = vld [vmem:[#allocation6 + $0x4a0] sm:$0xff]
    %v217 = vld [vmem:[#allocation6 + $0x4a8] sm:$0xff]
    %v218 = vld [vmem:[#allocation6 + $0x4b0] sm:$0xff]
    %v219 = vld [vmem:[#allocation6 + $0x4b8] sm:$0xff]
    %v220 = vld [vmem:[#allocation6 + $0x4c0] sm:$0xff]
    %v221 = vld [vmem:[#allocation6 + $0x4c8] sm:$0xff]
    %v222 = vld [vmem:[#allocation6 + $0x4d0] sm:$0xff]
    %v223 = vld [vmem:[#allocation6 + $0x4d8] sm:$0xff]
    %v224 = vld [vmem:[#allocation6 + $0x4e0] sm:$0xff]
    %v225 = vld [vmem:[#allocation6 + $0x4e8] sm:$0xff]
    %v226 = vld [vmem:[#allocation6 + $0x4f0] sm:$0xff]
    %v227 = vld [vmem:[#allocation6 + $0x4f8] sm:$0xff]
    %v228 = vld [vmem:[#allocation6 + $0x500] sm:$0xff]
    %v229 = vld [vmem:[#allocation6 + $0x508] sm:$0xff]
    %v230 = vld [vmem:[#allocation6 + $0x510] sm:$0xff]
    %v231 = vld [vmem:[#allocation6 + $0x518] sm:$0xff]
    %v232 = vld [vmem:[#allocation6 + $0x520] sm:$0xff]
    %v233 = vld [vmem:[#allocation6 + $0x528] sm:$0xff]
    %v234 = vld [vmem:[#allocation6 + $0x530] sm:$0xff]
    %v235 = vld [vmem:[#allocation6 + $0x538] sm:$0xff]
    %v236 = vld [vmem:[#allocation6 + $0x540] sm:$0xff]
    %v237 = vld [vmem:[#allocation6 + $0x548] sm:$0xff]
    %v238 = vld [vmem:[#allocation6 + $0x550] sm:$0xff]
    %v239 = vld [vmem:[#allocation6 + $0x558] sm:$0xff]
    %v240 = vld [vmem:[#allocation6 + $0x560] sm:$0xff]
    %v241 = vld [vmem:[#allocation6 + $0x568] sm:$0xff]
    %v242 = vld [vmem:[#allocation6 + $0x570] sm:$0xff]
    %v243 = vld [vmem:[#allocation6 + $0x578] sm:$0xff]
    %v244 = vld [vmem:[#allocation6 + $0x580] sm:$0xff]
    %v245 = vld [vmem:[#allocation6 + $0x588] sm:$0xff]
    %v246 = vld [vmem:[#allocation6 + $0x590] sm:$0xff]
    %v247 = vld [vmem:[#allocation6 + $0x598] sm:$0xff]
    %v248 = vld [vmem:[#allocation6 + $0x5a0] sm:$0xff]
    %v249 = vld [vmem:[#allocation6 + $0x5a8] sm:$0xff]
    %v250 = vld [vmem:[#allocation6 + $0x5b0] sm:$0xff]
    %v251 = vld [vmem:[#allocation6 + $0x5b8] sm:$0xff]
    %v252 = vld [vmem:[#allocation6 + $0x5c0] sm:$0xff]
    %v253 = vld [vmem:[#allocation6 + $0x5c8] sm:$0xff]
    %v254 = vld [vmem:[#allocation6 + $0x5d0] sm:$0xff]
    %v255 = vld [vmem:[#allocation6 + $0x5d8] sm:$0xff]
    %v256 = vld [vmem:[#allocation6 + $0x5e0] sm:$0xff]
    %v257 = vld [vmem:[#allocation6 + $0x5e8] sm:$0xff]
    %v258 = vld [vmem:[#allocation6 + $0x5f0] sm:$0xff]
    %v259 = vld [vmem:[#allocation6 + $0x5f8] sm:$0xff]
    %v260 = vld [vmem:[#allocation6 + $0x600] sm:$0xff]
    %v261 = vld [vmem:[#allocation6 + $0x608] sm:$0xff]
    %v262 = vld [vmem:[#allocation6 + $0x610] sm:$0xff]
    %v263 = vld [vmem:[#allocation6 + $0x618] sm:$0xff]
    %v264 = vld [vmem:[#allocation6 + $0x620] sm:$0xff]
    %v265 = vld [vmem:[#allocation6 + $0x628] sm:$0xff]
    %v266 = vld [vmem:[#allocation6 + $0x630] sm:$0xff]
    %v267 = vld [vmem:[#allocation6 + $0x638] sm:$0xff]
    %v268 = vld [vmem:[#allocation6 + $0x640] sm:$0xff]
    %v269 = vld [vmem:[#allocation6 + $0x648] sm:$0xff]
    %v270 = vld [vmem:[#allocation6 + $0x650] sm:$0xff]
    %v271 = vld [vmem:[#allocation6 + $0x658] sm:$0xff]
    %v272 = vld [vmem:[#allocation6 + $0x660] sm:$0xff]
    %v273 = vld [vmem:[#allocation6 + $0x668] sm:$0xff]
    %v274 = vld [vmem:[#allocation6 + $0x670] sm:$0xff]
    %v275 = vld [vmem:[#allocation6 + $0x678] sm:$0xff]
    %v276 = vld [vmem:[#allocation6 + $0x680] sm:$0xff]
    %v277 = vld [vmem:[#allocation6 + $0x688] sm:$0xff]
    %v278 = vld [vmem:[#allocation6 + $0x690] sm:$0xff]
    %v279 = vld [vmem:[#allocation6 + $0x698] sm:$0xff]
    %v280 = vld [vmem:[#allocation6 + $0x6a0] sm:$0xff]
    %v281 = vld [vmem:[#allocation6 + $0x6a8] sm:$0xff]
    %v282 = vld [vmem:[#allocation6 + $0x6b0] sm:$0xff]
    %v283 = vld [vmem:[#allocation6 + $0x6b8] sm:$0xff]
    %v284 = vld [vmem:[#allocation6 + $0x6c0] sm:$0xff]
    %v285 = vld [vmem:[#allocation6 + $0x6c8] sm:$0xff]
    %v286 = vld [vmem:[#allocation6 + $0x6d0] sm:$0xff]
    %v287 = vld [vmem:[#allocation6 + $0x6d8] sm:$0xff]
    %v288 = vld [vmem:[#allocation6 + $0x6e0] sm:$0xff]
    %v289 = vld [vmem:[#allocation6 + $0x6e8] sm:$0xff]
    %v290 = vld [vmem:[#allocation6 + $0x6f0] sm:$0xff]
    %v291 = vld [vmem:[#allocation6 + $0x6f8] sm:$0xff]
    %v292 = vld [vmem:[#allocation6 + $0x700] sm:$0xff]
    %v293 = vld [vmem:[#allocation6 + $0x708] sm:$0xff]
    %v294 = vld [vmem:[#allocation6 + $0x710] sm:$0xff]
    %v295 = vld [vmem:[#allocation6 + $0x718] sm:$0xff]
    %v296 = vld [vmem:[#allocation6 + $0x720] sm:$0xff]
    %v297 = vld [vmem:[#allocation6 + $0x728] sm:$0xff]
    %v298 = vld [vmem:[#allocation6 + $0x730] sm:$0xff]
    %v299 = vld [vmem:[#allocation6 + $0x738] sm:$0xff]
    %v300 = vld [vmem:[#allocation6 + $0x740] sm:$0xff]
    %v301 = vld [vmem:[#allocation6 + $0x748] sm:$0xff]
    %v302 = vld [vmem:[#allocation6 + $0x750] sm:$0xff]
    %v303 = vld [vmem:[#allocation6 + $0x758] sm:$0xff]
    %v304 = vld [vmem:[#allocation6 + $0x760] sm:$0xff]
    %v305 = vld [vmem:[#allocation6 + $0x768] sm:$0xff]
    %v306 = vld [vmem:[#allocation6 + $0x770] sm:$0xff]
    %v307 = vld [vmem:[#allocation6 + $0x778] sm:$0xff]
    %v308 = vld [vmem:[#allocation6 + $0x780] sm:$0xff]
    %v309 = vld [vmem:[#allocation6 + $0x788] sm:$0xff]
    %v310 = vld [vmem:[#allocation6 + $0x790] sm:$0xff]
    %v311 = vld [vmem:[#allocation6 + $0x798] sm:$0xff]
    %v312 = vld [vmem:[#allocation6 + $0x7a0] sm:$0xff]
    %v313 = vld [vmem:[#allocation6 + $0x7a8] sm:$0xff]
    %v314 = vld [vmem:[#allocation6 + $0x7b0] sm:$0xff]
    %v315 = vld [vmem:[#allocation6 + $0x7b8] sm:$0xff]
    %v316 = vld [vmem:[#allocation6 + $0x7c0] sm:$0xff]
    %v317 = vld [vmem:[#allocation6 + $0x7c8] sm:$0xff]
    %v318 = vld [vmem:[#allocation6 + $0x7d0] sm:$0xff]
    %v319 = vld [vmem:[#allocation6 + $0x7d8] sm:$0xff]
    %v320 = vld [vmem:[#allocation6 + $0x7e0] sm:$0xff]
    %v321 = vld [vmem:[#allocation6 + $0x7e8] sm:$0xff]
    %v322 = vld [vmem:[#allocation6 + $0x7f0] sm:$0xff]
    %v323 = vld [vmem:[#allocation6 + $0x7f8] sm:$0xff]
    %v324 = vld [vmem:[#allocation6 + $0x800] sm:$0xff]
    %v325 = vld [vmem:[#allocation6 + $0x808] sm:$0xff]
    %v326 = vld [vmem:[#allocation6 + $0x810] sm:$0xff]
    %v327 = vld [vmem:[#allocation6 + $0x818] sm:$0xff]
    %v328 = vld [vmem:[#allocation6 + $0x820] sm:$0xff]
    %v329 = vld [vmem:[#allocation6 + $0x828] sm:$0xff]
    %v330 = vld [vmem:[#allocation6 + $0x830] sm:$0xff]
    %v331 = vld [vmem:[#allocation6 + $0x838] sm:$0xff]
    %v332 = vld [vmem:[#allocation6 + $0x840] sm:$0xff]
    %v333 = vld [vmem:[#allocation6 + $0x848] sm:$0xff]
    %v334 = vld [vmem:[#allocation6 + $0x850] sm:$0xff]
    %v335 = vld [vmem:[#allocation6 + $0x858] sm:$0xff]
    %v336 = vld [vmem:[#allocation6 + $0x860] sm:$0xff]
    %v337 = vld [vmem:[#allocation6 + $0x868] sm:$0xff]
    %v338 = vld [vmem:[#allocation6 + $0x870] sm:$0xff]
    %v339 = vld [vmem:[#allocation6 + $0x878] sm:$0xff]
    %v340 = vld [vmem:[#allocation6 + $0x880] sm:$0xff]
    %v341 = vld [vmem:[#allocation6 + $0x888] sm:$0xff]
    %v342 = vld [vmem:[#allocation6 + $0x890] sm:$0xff]
    %v343 = vld [vmem:[#allocation6 + $0x898] sm:$0xff]
    %v344 = vld [vmem:[#allocation6 + $0x8a0] sm:$0xff]
    %v345 = vld [vmem:[#allocation6 + $0x8a8] sm:$0xff]
    %v346 = vld [vmem:[#allocation6 + $0x8b0] sm:$0xff]
    %v347 = vld [vmem:[#allocation6 + $0x8b8] sm:$0xff]
    %v348 = vld [vmem:[#allocation6 + $0x8c0] sm:$0xff]
    %v349 = vld [vmem:[#allocation6 + $0x8c8] sm:$0xff]
    %v350 = vld [vmem:[#allocation6 + $0x8d0] sm:$0xff]
    %v351 = vld [vmem:[#allocation6 + $0x8d8] sm:$0xff]
    %v352 = vld [vmem:[#allocation6 + $0x8e0] sm:$0xff]
    %v353 = vld [vmem:[#allocation6 + $0x8e8] sm:$0xff]
    %v354 = vld [vmem:[#allocation6 + $0x8f0] sm:$0xff]
    %v355 = vld [vmem:[#allocation6 + $0x8f8] sm:$0xff]
    %v356 = vld [vmem:[#allocation6 + $0x900] sm:$0xff]
    %v357 = vld [vmem:[#allocation6 + $0x908] sm:$0xff]
    %v358 = vld [vmem:[#allocation6 + $0x910] sm:$0xff]
    %v359 = vld [vmem:[#allocation6 + $0x918] sm:$0xff]
    %v360 = vld [vmem:[#allocation6 + $0x920] sm:$0xff]
    %v361 = vld [vmem:[#allocation6 + $0x928] sm:$0xff]
    %v362 = vld [vmem:[#allocation6 + $0x930] sm:$0xff]
    %v363 = vld [vmem:[#allocation6 + $0x938] sm:$0xff]
    %v364 = vld [vmem:[#allocation6 + $0x940] sm:$0xff]
    %v365 = vld [vmem:[#allocation6 + $0x948] sm:$0xff]
    %v366 = vld [vmem:[#allocation6 + $0x950] sm:$0xff]
    %v367 = vld [vmem:[#allocation6 + $0x958] sm:$0xff]
    %v368 = vld [vmem:[#allocation6 + $0x960] sm:$0xff]
    %v369 = vld [vmem:[#allocation6 + $0x968] sm:$0xff]
    %v370 = vld [vmem:[#allocation6 + $0x970] sm:$0xff]
    %v371 = vld [vmem:[#allocation6 + $0x978] sm:$0xff]
    %v372 = vld [vmem:[#allocation6 + $0x980] sm:$0xff]
    %v373 = vld [vmem:[#allocation6 + $0x988] sm:$0xff]
    %v374 = vld [vmem:[#allocation6 + $0x990] sm:$0xff]
    %v375 = vld [vmem:[#allocation6 + $0x998] sm:$0xff]
    %v376 = vld [vmem:[#allocation6 + $0x9a0] sm:$0xff]
    %v377 = vld [vmem:[#allocation6 + $0x9a8] sm:$0xff]
    %v378 = vld [vmem:[#allocation6 + $0x9b0] sm:$0xff]
    %v379 = vld [vmem:[#allocation6 + $0x9b8] sm:$0xff]
    %v380 = vld [vmem:[#allocation6 + $0x9c0] sm:$0xff]
    %v381 = vld [vmem:[#allocation6 + $0x9c8] sm:$0xff]
    %v382 = vld [vmem:[#allocation6 + $0x9d0] sm:$0xff]
    %v383 = vld [vmem:[#allocation6 + $0x9d8] sm:$0xff]
    %v384 = vld [vmem:[#allocation6 + $0x9e0] sm:$0xff]
    %v385 = vld [vmem:[#allocation6 + $0x9e8] sm:$0xff]
    %v386 = vld [vmem:[#allocation6 + $0x9f0] sm:$0xff]
    %v387 = vld [vmem:[#allocation6 + $0x9f8] sm:$0xff]
    %v388 = vld [vmem:[#allocation6 + $0xa00] sm:$0xff]
    %v389 = vld [vmem:[#allocation6 + $0xa08] sm:$0xff]
    %v390 = vld [vmem:[#allocation6 + $0xa10] sm:$0xff]
    %v391 = vld [vmem:[#allocation6 + $0xa18] sm:$0xff]
    %v392 = vld [vmem:[#allocation6 + $0xa20] sm:$0xff]
    %v393 = vld [vmem:[#allocation6 + $0xa28] sm:$0xff]
    %v394 = vld [vmem:[#allocation6 + $0xa30] sm:$0xff]
    %v395 = vld [vmem:[#allocation6 + $0xa38] sm:$0xff]
    %v396 = vld [vmem:[#allocation6 + $0xa40] sm:$0xff]
    %v397 = vld [vmem:[#allocation6 + $0xa48] sm:$0xff]
    %v398 = vld [vmem:[#allocation6 + $0xa50] sm:$0xff]
    %v399 = vld [vmem:[#allocation6 + $0xa58] sm:$0xff]
    %v400 = vld [vmem:[#allocation6 + $0xa60] sm:$0xff]
    %v401 = vld [vmem:[#allocation6 + $0xa68] sm:$0xff]
    %v402 = vld [vmem:[#allocation6 + $0xa70] sm:$0xff]
    %v403 = vld [vmem:[#allocation6 + $0xa78] sm:$0xff]
    %v404 = vld [vmem:[#allocation6 + $0xa80] sm:$0xff]
    %v405 = vld [vmem:[#allocation6 + $0xa88] sm:$0xff]
    %v406 = vld [vmem:[#allocation6 + $0xa90] sm:$0xff]
    %v407 = vld [vmem:[#allocation6 + $0xa98] sm:$0xff]
    %v408 = vld [vmem:[#allocation6 + $0xaa0] sm:$0xff]
    %v409 = vld [vmem:[#allocation6 + $0xaa8] sm:$0xff]
    %v410 = vld [vmem:[#allocation6 + $0xab0] sm:$0xff]
    %v411 = vld [vmem:[#allocation6 + $0xab8] sm:$0xff]
    %v412 = vld [vmem:[#allocation6 + $0xac0] sm:$0xff]
    %v413 = vld [vmem:[#allocation6 + $0xac8] sm:$0xff]
    %v414 = vld [vmem:[#allocation6 + $0xad0] sm:$0xff]
    %v415 = vld [vmem:[#allocation6 + $0xad8] sm:$0xff]
    %v416 = vld [vmem:[#allocation6 + $0xae0] sm:$0xff]
    %v417 = vld [vmem:[#allocation6 + $0xae8] sm:$0xff]
    %v418 = vld [vmem:[#allocation6 + $0xaf0] sm:$0xff]
    %v419 = vld [vmem:[#allocation6 + $0xaf8] sm:$0xff]
    %v420 = vld [vmem:[#allocation6 + $0xb00] sm:$0xff]
    %v421 = vld [vmem:[#allocation6 + $0xb08] sm:$0xff]
    %v422 = vld [vmem:[#allocation6 + $0xb10] sm:$0xff]
    %v423 = vld [vmem:[#allocation6 + $0xb18] sm:$0xff]
    %v424 = vld [vmem:[#allocation6 + $0xb20] sm:$0xff]
    %v425 = vld [vmem:[#allocation6 + $0xb28] sm:$0xff]
    %v426 = vld [vmem:[#allocation6 + $0xb30] sm:$0xff]
    %v427 = vld [vmem:[#allocation6 + $0xb38] sm:$0xff]
    %v428 = vld [vmem:[#allocation6 + $0xb40] sm:$0xff]
    %v429 = vld [vmem:[#allocation6 + $0xb48] sm:$0xff]
    %v430 = vld [vmem:[#allocation6 + $0xb50] sm:$0xff]
    %v431 = vld [vmem:[#allocation6 + $0xb58] sm:$0xff]
    %v432 = vld [vmem:[#allocation6 + $0xb60] sm:$0xff]
    %v433 = vld [vmem:[#allocation6 + $0xb68] sm:$0xff]
    %v434 = vld [vmem:[#allocation6 + $0xb70] sm:$0xff]
    %v435 = vld [vmem:[#allocation6 + $0xb78] sm:$0xff]
    %v436 = vld [vmem:[#allocation6 + $0xb80] sm:$0xff]
    %v437 = vld [vmem:[#allocation6 + $0xb88] sm:$0xff]
    %v438 = vld [vmem:[#allocation6 + $0xb90] sm:$0xff]
    %v439 = vld [vmem:[#allocation6 + $0xb98] sm:$0xff]
    %v440 = vld [vmem:[#allocation6 + $0xba0] sm:$0xff]
    %v441 = vld [vmem:[#allocation6 + $0xba8] sm:$0xff]
    %v442 = vld [vmem:[#allocation6 + $0xbb0] sm:$0xff]
    %v443 = vld [vmem:[#allocation6 + $0xbb8] sm:$0xff]
    %v444 = vld [vmem:[#allocation6 + $0xbc0] sm:$0xff]
    %v445 = vld [vmem:[#allocation6 + $0xbc8] sm:$0xff]
    %v446 = vld [vmem:[#allocation6 + $0xbd0] sm:$0xff]
    %v447 = vld [vmem:[#allocation6 + $0xbd8] sm:$0xff]
    %v448 = vld [vmem:[#allocation6 + $0xbe0] sm:$0xff]
    %v449 = vld [vmem:[#allocation6 + $0xbe8] sm:$0xff]
    %v450 = vld [vmem:[#allocation6 + $0xbf0] sm:$0xff]
    %v451 = vld [vmem:[#allocation6 + $0xbf8] sm:$0xff]
    %452 = vmatprep.subr.mxu0 0.0
    %453 = vmatpush1.msra.mxu0 %v68
    %454 = vmatprep.subr.mxu0 0.0
    %455 = vmatpush1.msra.mxu0 %v69
    %456 = vmatprep.subr.mxu0 0.0
    %457 = vmatpush1.msra.mxu0 %v70
    %458 = vmatprep.subr.mxu0 0.0
    %459 = vmatpush1.msra.mxu0 %v71
    %460 = vmatprep.subr.mxu0 0.0
    %461 = vmatpush1.msra.mxu0 %v72
    %462 = vmatprep.subr.mxu0 0.0
    %463 = vmatpush1.msra.mxu0 %v73
    %464 = vmatprep.subr.mxu0 0.0
    %465 = vmatpush1.msra.mxu0 %v74
    %466 = vmatprep.subr.mxu0 0.0
    %467 = vmatpush1.msra.mxu0 %v75
    %468 = vmatprep.subr.mxu0 0.0
    %469 = vmatpush1.msra.mxu0 %v76
    %470 = vmatprep.subr.mxu0 0.0
    %471 = vmatpush1.msra.mxu0 %v77
    %472 = vmatprep.subr.mxu0 0.0
    %473 = vmatpush1.msra.mxu0 %v78
    %474 = vmatprep.subr.mxu0 0.0
    %475 = vmatpush1.msra.mxu0 %v79
    %476 = vmatprep.subr.mxu0 0.0
    %477 = vmatpush1.msra.mxu0 %v80
    %478 = vmatprep.subr.mxu0 0.0
    %479 = vmatpush1.msra.mxu0 %v81
    %480 = vmatprep.subr.mxu0 0.0
    %481 = vmatpush1.msra.mxu0 %v82
    %482 = vmatprep.subr.mxu0 0.0
    %483 = vmatpush1.msra.mxu0 %v83
    %484 = vmatprep.subr.mxu0 0.0
    %485 = vmatpush1.msra.mxu0 %v84
    %486 = vmatprep.subr.mxu0 0.0
    %487 = vmatpush1.msra.mxu0 %v85
    %488 = vmatprep.subr.mxu0 0.0
    %489 = vmatpush1.msra.mxu0 %v86
    %490 = vmatprep.subr.mxu0 0.0
    %491 = vmatpush1.msra.mxu0 %v87
    %492 = vmatprep.subr.mxu0 0.0
    %493 = vmatpush1.msra.mxu0 %v88
    %494 = vmatprep.subr.mxu0 0.0
    %495 = vmatpush1.msra.mxu0 %v89
    %496 = vmatprep.subr.mxu0 0.0
    %497 = vmatpush1.msra.mxu0 %v90
    %498 = vmatprep.subr.mxu0 0.0
    %499 = vmatpush1.msra.mxu0 %v91
    %500 = vmatprep.subr.mxu0 0.0
    %501 = vmatpush1.msra.mxu0 %v92
    %502 = vmatprep.subr.mxu0 0.0
    %503 = vmatpush1.msra.mxu0 %v93
    %504 = vmatprep.subr.mxu0 0.0
    %505 = vmatpush1.msra.mxu0 %v94
    %506 = vmatprep.subr.mxu0 0.0
    %507 = vmatpush1.msra.mxu0 %v95
    %508 = vmatprep.subr.mxu0 0.0
    %509 = vmatpush1.msra.mxu0 %v96
    %510 = vmatprep.subr.mxu0 0.0
    %511 = vmatpush1.msra.mxu0 %v97
    %512 = vmatprep.subr.mxu0 0.0
    %513 = vmatpush1.msra.mxu0 %v98
    %514 = vmatprep.subr.mxu0 0.0
    %515 = vmatpush1.msra.mxu0 %v99
    %516 = vmatprep.mubr.f32.mxu0 %v45
    %517 = vmatmul.mubr.f32.gmra.mrb[0].mxu0 %v44
    %v518 = vpop.f32.mrb[0].mxu0
    %v519 = vadd.f32 0.0, %v518
    %v520 = vpop.f32.mrb[0].mxu0
    %521 = vdwg.mxu0
    %522 = vmatprep.subr.mxu0 0.0
    %523 = vmatpush1.msra.mxu0 %v100
    %524 = vmatprep.subr.mxu0 0.0
    %525 = vmatpush1.msra.mxu0 %v101
    %526 = vmatprep.subr.mxu0 0.0
    %527 = vmatpush1.msra.mxu0 %v102
    %528 = vmatprep.subr.mxu0 0.0
    %529 = vmatpush1.msra.mxu0 %v103
    %530 = vmatprep.subr.mxu0 0.0
    %531 = vmatpush1.msra.mxu0 %v104
    %532 = vmatprep.subr.mxu0 0.0
    %533 = vmatpush1.msra.mxu0 %v105
    %534 = vmatprep.subr.mxu0 0.0
    %535 = vmatpush1.msra.mxu0 %v106
    %536 = vmatprep.subr.mxu0 0.0
    %537 = vmatpush1.msra.mxu0 %v107
    %538 = vmatprep.subr.mxu0 0.0
    %539 = vmatpush1.msra.mxu0 %v108
    %540 = vmatprep.subr.mxu0 0.0
    %541 = vmatpush1.msra.mxu0 %v109
    %542 = vmatprep.subr.mxu0 0.0
    %543 = vmatpush1.msra.mxu0 %v110
    %544 = vmatprep.subr.mxu0 0.0
    %545 = vmatpush1.msra.mxu0 %v111
    %546 = vmatprep.subr.mxu0 0.0
    %547 = vmatpush1.msra.mxu0 %v112
    %548 = vmatprep.subr.mxu0 0.0
    %549 = vmatpush1.msra.mxu0 %v113
    %550 = vmatprep.subr.mxu0 0.0
    %551 = vmatpush1.msra.mxu0 %v114
    %552 = vmatprep.subr.mxu0 0.0
    %553 = vmatpush1.msra.mxu0 %v115
    %554 = vmatprep.subr.mxu0 0.0
    %555 = vmatpush1.msra.mxu0 %v116
    %556 = vmatprep.subr.mxu0 0.0
    %557 = vmatpush1.msra.mxu0 %v117
    %558 = vmatprep.subr.mxu0 0.0
    %559 = vmatpush1.msra.mxu0 %v118
    %560 = vmatprep.subr.mxu0 0.0
    %561 = vmatpush1.msra.mxu0 %v119
    %562 = vmatprep.subr.mxu0 0.0
    %563 = vmatpush1.msra.mxu0 %v120
    %564 = vmatprep.subr.mxu0 0.0
    %565 = vmatpush1.msra.mxu0 %v121
    %566 = vmatprep.subr.mxu0 0.0
    %567 = vmatpush1.msra.mxu0 %v122
    %568 = vmatprep.subr.mxu0 0.0
    %569 = vmatpush1.msra.mxu0 %v123
    %570 = vmatprep.subr.mxu0 0.0
    %571 = vmatpush1.msra.mxu0 %v124
    %572 = vmatprep.subr.mxu0 0.0
    %573 = vmatpush1.msra.mxu0 %v125
    %574 = vmatprep.subr.mxu0 0.0
    %575 = vmatpush1.msra.mxu0 %v126
    %576 = vmatprep.subr.mxu0 0.0
    %577 = vmatpush1.msra.mxu0 %v127
    %578 = vmatprep.subr.mxu0 0.0
    %579 = vmatpush1.msra.mxu0 %v128
    %580 = vmatprep.subr.mxu0 0.0
    %581 = vmatpush1.msra.mxu0 %v129
    %582 = vmatprep.subr.mxu0 0.0
    %583 = vmatpush1.msra.mxu0 %v130
    %584 = vmatprep.subr.mxu0 0.0
    %585 = vmatpush1.msra.mxu0 %v131
    %586 = vmatprep.mubr.f32.mxu0 %v47
    %587 = vmatmul.mubr.f32.gmra.mrb[0].mxu0 %v46
    %v588 = vpop.f32.mrb[0].mxu0
    %v589 = vadd.f32 %v519, %v588
    %v590 = vpop.f32.mrb[0].mxu0
    %591 = vdwg.mxu0
    %592 = vmatprep.subr.mxu0 0.0
    %593 = vmatpush1.msra.mxu0 %v132
    %594 = vmatprep.subr.mxu0 0.0
    %595 = vmatpush1.msra.mxu0 %v133
    %596 = vmatprep.subr.mxu0 0.0
    %597 = vmatpush1.msra.mxu0 %v134
    %598 = vmatprep.subr.mxu0 0.0
    %599 = vmatpush1.msra.mxu0 %v135
    %600 = vmatprep.subr.mxu0 0.0
    %601 = vmatpush1.msra.mxu0 %v136
    %602 = vmatprep.subr.mxu0 0.0
    %603 = vmatpush1.msra.mxu0 %v137
    %604 = vmatprep.subr.mxu0 0.0
    %605 = vmatpush1.msra.mxu0 %v138
    %606 = vmatprep.subr.mxu0 0.0
    %607 = vmatpush1.msra.mxu0 %v139
    %608 = vmatprep.subr.mxu0 0.0
    %609 = vmatpush1.msra.mxu0 %v140
    %610 = vmatprep.subr.mxu0 0.0
    %611 = vmatpush1.msra.mxu0 %v141
    %612 = vmatprep.subr.mxu0 0.0
    %613 = vmatpush1.msra.mxu0 %v142
    %614 = vmatprep.subr.mxu0 0.0
    %615 = vmatpush1.msra.mxu0 %v143
    %616 = vmatprep.subr.mxu0 0.0
    %617 = vmatpush1.msra.mxu0 %v144
    %618 = vmatprep.subr.mxu0 0.0
    %619 = vmatpush1.msra.mxu0 %v145
    %620 = vmatprep.subr.mxu0 0.0
    %621 = vmatpush1.msra.mxu0 %v146
    %622 = vmatprep.subr.mxu0 0.0
    %623 = vmatpush1.msra.mxu0 %v147
    %624 = vmatprep.subr.mxu0 0.0
    %625 = vmatpush1.msra.mxu0 %v148
    %626 = vmatprep.subr.mxu0 0.0
    %627 = vmatpush1.msra.mxu0 %v149
    %628 = vmatprep.subr.mxu0 0.0
    %629 = vmatpush1.msra.mxu0 %v150
    %630 = vmatprep.subr.mxu0 0.0
    %631 = vmatpush1.msra.mxu0 %v151
    %632 = vmatprep.subr.mxu0 0.0
    %633 = vmatpush1.msra.mxu0 %v152
    %634 = vmatprep.subr.mxu0 0.0
    %635 = vmatpush1.msra.mxu0 %v153
    %636 = vmatprep.subr.mxu0 0.0
    %637 = vmatpush1.msra.mxu0 %v154
    %638 = vmatprep.subr.mxu0 0.0
    %639 = vmatpush1.msra.mxu0 %v155
    %640 = vmatprep.subr.mxu0 0.0
    %641 = vmatpush1.msra.mxu0 %v156
    %642 = vmatprep.subr.mxu0 0.0
    %643 = vmatpush1.msra.mxu0 %v157
    %644 = vmatprep.subr.mxu0 0.0
    %645 = vmatpush1.msra.mxu0 %v158
    %646 = vmatprep.subr.mxu0 0.0
    %647 = vmatpush1.msra.mxu0 %v159
    %648 = vmatprep.subr.mxu0 0.0
    %649 = vmatpush1.msra.mxu0 %v160
    %650 = vmatprep.subr.mxu0 0.0
    %651 = vmatpush1.msra.mxu0 %v161
    %652 = vmatprep.subr.mxu0 0.0
    %653 = vmatpush1.msra.mxu0 %v162
    %654 = vmatprep.subr.mxu0 0.0
    %655 = vmatpush1.msra.mxu0 %v163
    %656 = vmatprep.mubr.f32.mxu0 %v49
    %657 = vmatmul.mubr.f32.gmra.mrb[0].mxu0 %v48
    %v658 = vpop.f32.mrb[0].mxu0
    %v659 = vadd.f32 %v589, %v658
    %v660 = vpop.f32.mrb[0].mxu0
    %661 = vdwg.mxu0
    %662 = vmatprep.subr.mxu0 0.0
    %663 = vmatpush1.msra.mxu0 %v164
    %664 = vmatprep.subr.mxu0 0.0
    %665 = vmatpush1.msra.mxu0 %v165
    %666 = vmatprep.subr.mxu0 0.0
    %667 = vmatpush1.msra.mxu0 %v166
    %668 = vmatprep.subr.mxu0 0.0
    %669 = vmatpush1.msra.mxu0 %v167
    %670 = vmatprep.subr.mxu0 0.0
    %671 = vmatpush1.msra.mxu0 %v168
    %672 = vmatprep.subr.mxu0 0.0
    %673 = vmatpush1.msra.mxu0 %v169
    %674 = vmatprep.subr.mxu0 0.0
    %675 = vmatpush1.msra.mxu0 %v170
    %676 = vmatprep.subr.mxu0 0.0
    %677 = vmatpush1.msra.mxu0 %v171
    %678 = vmatprep.subr.mxu0 0.0
    %679 = vmatpush1.msra.mxu0 %v172
    %680 = vmatprep.subr.mxu0 0.0
    %681 = vmatpush1.msra.mxu0 %v173
    %682 = vmatprep.subr.mxu0 0.0
    %683 = vmatpush1.msra.mxu0 %v174
    %684 = vmatprep.subr.mxu0 0.0
    %685 = vmatpush1.msra.mxu0 %v175
    %686 = vmatprep.subr.mxu0 0.0
    %687 = vmatpush1.msra.mxu0 %v176
    %688 = vmatprep.subr.mxu0 0.0
    %689 = vmatpush1.msra.mxu0 %v177
    %690 = vmatprep.subr.mxu0 0.0
    %691 = vmatpush1.msra.mxu0 %v178
    %692 = vmatprep.subr.mxu0 0.0
    %693 = vmatpush1.msra.mxu0 %v179
    %694 = vmatprep.subr.mxu0 0.0
    %695 = vmatpush1.msra.mxu0 %v180
    %696 = vmatprep.subr.mxu0 0.0
    %697 = vmatpush1.msra.mxu0 %v181
    %698 = vmatprep.subr.mxu0 0.0
    %699 = vmatpush1.msra.mxu0 %v182
    %700 = vmatprep.subr.mxu0 0.0
    %701 = vmatpush1.msra.mxu0 %v183
    %702 = vmatprep.subr.mxu0 0.0
    %703 = vmatpush1.msra.mxu0 %v184
    %704 = vmatprep.subr.mxu0 0.0
    %705 = vmatpush1.msra.mxu0 %v185
    %706 = vmatprep.subr.mxu0 0.0
    %707 = vmatpush1.msra.mxu0 %v186
    %708 = vmatprep.subr.mxu0 0.0
    %709 = vmatpush1.msra.mxu0 %v187
    %710 = vmatprep.subr.mxu0 0.0
    %711 = vmatpush1.msra.mxu0 %v188
    %712 = vmatprep.subr.mxu0 0.0
    %713 = vmatpush1.msra.mxu0 %v189
    %714 = vmatprep.subr.mxu0 0.0
    %715 = vmatpush1.msra.mxu0 %v190
    %716 = vmatprep.subr.mxu0 0.0
    %717 = vmatpush1.msra.mxu0 %v191
    %718 = vmatprep.subr.mxu0 0.0
    %719 = vmatpush1.msra.mxu0 %v192
    %720 = vmatprep.subr.mxu0 0.0
    %721 = vmatpush1.msra.mxu0 %v193
    %722 = vmatprep.subr.mxu0 0.0
    %723 = vmatpush1.msra.mxu0 %v194
    %724 = vmatprep.subr.mxu0 0.0
    %725 = vmatpush1.msra.mxu0 %v195
    %726 = vmatprep.mubr.f32.mxu0 %v51
    %727 = vmatmul.mubr.f32.gmra.mrb[0].mxu0 %v50
    %v728 = vpop.f32.mrb[0].mxu0
    %v729 = vadd.f32 %v659, %v728
    %v730 = vpop.f32.mrb[0].mxu0
    %731 = vdwg.mxu0
    %732 = vmatprep.subr.mxu0 0.0
    %733 = vmatpush1.msra.mxu0 %v196
    %734 = vmatprep.subr.mxu0 0.0
    %735 = vmatpush1.msra.mxu0 %v197
    %736 = vmatprep.subr.mxu0 0.0
    %737 = vmatpush1.msra.mxu0 %v198
    %738 = vmatprep.subr.mxu0 0.0
    %739 = vmatpush1.msra.mxu0 %v199
    %740 = vmatprep.subr.mxu0 0.0
    %741 = vmatpush1.msra.mxu0 %v200
    %742 = vmatprep.subr.mxu0 0.0
    %743 = vmatpush1.msra.mxu0 %v201
    %744 = vmatprep.subr.mxu0 0.0
    %745 = vmatpush1.msra.mxu0 %v202
    %746 = vmatprep.subr.mxu0 0.0
    %747 = vmatpush1.msra.mxu0 %v203
    %748 = vmatprep.subr.mxu0 0.0
    %749 = vmatpush1.msra.mxu0 %v204
    %750 = vmatprep.subr.mxu0 0.0
    %751 = vmatpush1.msra.mxu0 %v205
    %752 = vmatprep.subr.mxu0 0.0
    %753 = vmatpush1.msra.mxu0 %v206
    %754 = vmatprep.subr.mxu0 0.0
    %755 = vmatpush1.msra.mxu0 %v207
    %756 = vmatprep.subr.mxu0 0.0
    %757 = vmatpush1.msra.mxu0 %v208
    %758 = vmatprep.subr.mxu0 0.0
    %759 = vmatpush1.msra.mxu0 %v209
    %760 = vmatprep.subr.mxu0 0.0
    %761 = vmatpush1.msra.mxu0 %v210
    %762 = vmatprep.subr.mxu0 0.0
    %763 = vmatpush1.msra.mxu0 %v211
    %764 = vmatprep.subr.mxu0 0.0
    %765 = vmatpush1.msra.mxu0 %v212
    %766 = vmatprep.subr.mxu0 0.0
    %767 = vmatpush1.msra.mxu0 %v213
    %768 = vmatprep.subr.mxu0 0.0
    %769 = vmatpush1.msra.mxu0 %v214
    %770 = vmatprep.subr.mxu0 0.0
    %771 = vmatpush1.msra.mxu0 %v215
    %772 = vmatprep.subr.mxu0 0.0
    %773 = vmatpush1.msra.mxu0 %v216
    %774 = vmatprep.subr.mxu0 0.0
    %775 = vmatpush1.msra.mxu0 %v217
    %776 = vmatprep.subr.mxu0 0.0
    %777 = vmatpush1.msra.mxu0 %v218
    %778 = vmatprep.subr.mxu0 0.0
    %779 = vmatpush1.msra.mxu0 %v219
    %780 = vmatprep.subr.mxu0 0.0
    %781 = vmatpush1.msra.mxu0 %v220
    %782 = vmatprep.subr.mxu0 0.0
    %783 = vmatpush1.msra.mxu0 %v221
    %784 = vmatprep.subr.mxu0 0.0
    %785 = vmatpush1.msra.mxu0 %v222
    %786 = vmatprep.subr.mxu0 0.0
    %787 = vmatpush1.msra.mxu0 %v223
    %788 = vmatprep.subr.mxu0 0.0
    %789 = vmatpush1.msra.mxu0 %v224
    %790 = vmatprep.subr.mxu0 0.0
    %791 = vmatpush1.msra.mxu0 %v225
    %792 = vmatprep.subr.mxu0 0.0
    %793 = vmatpush1.msra.mxu0 %v226
    %794 = vmatprep.subr.mxu0 0.0
    %795 = vmatpush1.msra.mxu0 %v227
    %796 = vmatprep.mubr.f32.mxu0 %v53
    %797 = vmatmul.mubr.f32.gmra.mrb[0].mxu0 %v52
    %v798 = vpop.f32.mrb[0].mxu0
    %v799 = vadd.f32 %v729, %v798
    %v800 = vpop.f32.mrb[0].mxu0
    %801 = vdwg.mxu0
    %802 = vmatprep.subr.mxu0 0.0
    %803 = vmatpush1.msra.mxu0 %v228
    %804 = vmatprep.subr.mxu0 0.0
    %805 = vmatpush1.msra.mxu0 %v229
    %806 = vmatprep.subr.mxu0 0.0
    %807 = vmatpush1.msra.mxu0 %v230
    %808 = vmatprep.subr.mxu0 0.0
    %809 = vmatpush1.msra.mxu0 %v231
    %810 = vmatprep.subr.mxu0 0.0
    %811 = vmatpush1.msra.mxu0 %v232
    %812 = vmatprep.subr.mxu0 0.0
    %813 = vmatpush1.msra.mxu0 %v233
    %814 = vmatprep.subr.mxu0 0.0
    %815 = vmatpush1.msra.mxu0 %v234
    %816 = vmatprep.subr.mxu0 0.0
    %817 = vmatpush1.msra.mxu0 %v235
    %818 = vmatprep.subr.mxu0 0.0
    %819 = vmatpush1.msra.mxu0 %v236
    %820 = vmatprep.subr.mxu0 0.0
    %821 = vmatpush1.msra.mxu0 %v237
    %822 = vmatprep.subr.mxu0 0.0
    %823 = vmatpush1.msra.mxu0 %v238
    %824 = vmatprep.subr.mxu0 0.0
    %825 = vmatpush1.msra.mxu0 %v239
    %826 = vmatprep.subr.mxu0 0.0
    %827 = vmatpush1.msra.mxu0 %v240
    %828 = vmatprep.subr.mxu0 0.0
    %829 = vmatpush1.msra.mxu0 %v241
    %830 = vmatprep.subr.mxu0 0.0
    %831 = vmatpush1.msra.mxu0 %v242
    %832 = vmatprep.subr.mxu0 0.0
    %833 = vmatpush1.msra.mxu0 %v243
    %834 = vmatprep.subr.mxu0 0.0
    %835 = vmatpush1.msra.mxu0 %v244
    %836 = vmatprep.subr.mxu0 0.0
    %837 = vmatpush1.msra.mxu0 %v245
    %838 = vmatprep.subr.mxu0 0.0
    %839 = vmatpush1.msra.mxu0 %v246
    %840 = vmatprep.subr.mxu0 0.0
    %841 = vmatpush1.msra.mxu0 %v247
    %842 = vmatprep.subr.mxu0 0.0
    %843 = vmatpush1.msra.mxu0 %v248
    %844 = vmatprep.subr.mxu0 0.0
    %845 = vmatpush1.msra.mxu0 %v249
    %846 = vmatprep.subr.mxu0 0.0
    %847 = vmatpush1.msra.mxu0 %v250
    %848 = vmatprep.subr.mxu0 0.0
    %849 = vmatpush1.msra.mxu0 %v251
    %850 = vmatprep.subr.mxu0 0.0
    %851 = vmatpush1.msra.mxu0 %v252
    %852 = vmatprep.subr.mxu0 0.0
    %853 = vmatpush1.msra.mxu0 %v253
    %854 = vmatprep.subr.mxu0 0.0
    %855 = vmatpush1.msra.mxu0 %v254
    %856 = vmatprep.subr.mxu0 0.0
    %857 = vmatpush1.msra.mxu0 %v255
    %858 = vmatprep.subr.mxu0 0.0
    %859 = vmatpush1.msra.mxu0 %v256
    %860 = vmatprep.subr.mxu0 0.0
    %861 = vmatpush1.msra.mxu0 %v257
    %862 = vmatprep.subr.mxu0 0.0
    %863 = vmatpush1.msra.mxu0 %v258
    %864 = vmatprep.subr.mxu0 0.0
    %865 = vmatpush1.msra.mxu0 %v259
    %866 = vmatprep.mubr.f32.mxu0 %v55
    %867 = vmatmul.mubr.f32.gmra.mrb[0].mxu0 %v54
    %v868 = vpop.f32.mrb[0].mxu0
    %v869 = vadd.f32 %v799, %v868
    %v870 = vpop.f32.mrb[0].mxu0
    %871 = vdwg.mxu0
    %872 = vmatprep.subr.mxu0 0.0
    %873 = vmatpush1.msra.mxu0 %v260
    %874 = vmatprep.subr.mxu0 0.0
    %875 = vmatpush1.msra.mxu0 %v261
    %876 = vmatprep.subr.mxu0 0.0
    %877 = vmatpush1.msra.mxu0 %v262
    %878 = vmatprep.subr.mxu0 0.0
    %879 = vmatpush1.msra.mxu0 %v263
    %880 = vmatprep.subr.mxu0 0.0
    %881 = vmatpush1.msra.mxu0 %v264
    %882 = vmatprep.subr.mxu0 0.0
    %883 = vmatpush1.msra.mxu0 %v265
    %884 = vmatprep.subr.mxu0 0.0
    %885 = vmatpush1.msra.mxu0 %v266
    %886 = vmatprep.subr.mxu0 0.0
    %887 = vmatpush1.msra.mxu0 %v267
    %888 = vmatprep.subr.mxu0 0.0
    %889 = vmatpush1.msra.mxu0 %v268
    %890 = vmatprep.subr.mxu0 0.0
    %891 = vmatpush1.msra.mxu0 %v269
    %892 = vmatprep.subr.mxu0 0.0
    %893 = vmatpush1.msra.mxu0 %v270
    %894 = vmatprep.subr.mxu0 0.0
    %895 = vmatpush1.msra.mxu0 %v271
    %896 = vmatprep.subr.mxu0 0.0
    %897 = vmatpush1.msra.mxu0 %v272
    %898 = vmatprep.subr.mxu0 0.0
    %899 = vmatpush1.msra.mxu0 %v273
    %900 = vmatprep.subr.mxu0 0.0
    %901 = vmatpush1.msra.mxu0 %v274
    %902 = vmatprep.subr.mxu0 0.0
    %903 = vmatpush1.msra.mxu0 %v275
    %904 = vmatprep.subr.mxu0 0.0
    %905 = vmatpush1.msra.mxu0 %v276
    %906 = vmatprep.subr.mxu0 0.0
    %907 = vmatpush1.msra.mxu0 %v277
    %908 = vmatprep.subr.mxu0 0.0
    %909 = vmatpush1.msra.mxu0 %v278
    %910 = vmatprep.subr.mxu0 0.0
    %911 = vmatpush1.msra.mxu0 %v279
    %912 = vmatprep.subr.mxu0 0.0
    %913 = vmatpush1.msra.mxu0 %v280
    %914 = vmatprep.subr.mxu0 0.0
    %915 = vmatpush1.msra.mxu0 %v281
    %916 = vmatprep.subr.mxu0 0.0
    %917 = vmatpush1.msra.mxu0 %v282
    %918 = vmatprep.subr.mxu0 0.0
    %919 = vmatpush1.msra.mxu0 %v283
    %920 = vmatprep.subr.mxu0 0.0
    %921 = vmatpush1.msra.mxu0 %v284
    %922 = vmatprep.subr.mxu0 0.0
    %923 = vmatpush1.msra.mxu0 %v285
    %924 = vmatprep.subr.mxu0 0.0
    %925 = vmatpush1.msra.mxu0 %v286
    %926 = vmatprep.subr.mxu0 0.0
    %927 = vmatpush1.msra.mxu0 %v287
    %928 = vmatprep.subr.mxu0 0.0
    %929 = vmatpush1.msra.mxu0 %v288
    %930 = vmatprep.subr.mxu0 0.0
    %931 = vmatpush1.msra.mxu0 %v289
    %932 = vmatprep.subr.mxu0 0.0
    %933 = vmatpush1.msra.mxu0 %v290
    %934 = vmatprep.subr.mxu0 0.0
    %935 = vmatpush1.msra.mxu0 %v291
    %936 = vmatprep.mubr.f32.mxu0 %v57
    %937 = vmatmul.mubr.f32.gmra.mrb[0].mxu0 %v56
    %v938 = vpop.f32.mrb[0].mxu0
    %v939 = vadd.f32 %v869, %v938
    %v940 = vpop.f32.mrb[0].mxu0
    %941 = vdwg.mxu0
    %942 = vmatprep.subr.mxu0 0.0
    %943 = vmatpush1.msra.mxu0 %v292
    %944 = vmatprep.subr.mxu0 0.0
    %945 = vmatpush1.msra.mxu0 %v293
    %946 = vmatprep.subr.mxu0 0.0
    %947 = vmatpush1.msra.mxu0 %v294
    %948 = vmatprep.subr.mxu0 0.0
    %949 = vmatpush1.msra.mxu0 %v295
    %950 = vmatprep.subr.mxu0 0.0
    %951 = vmatpush1.msra.mxu0 %v296
    %952 = vmatprep.subr.mxu0 0.0
    %953 = vmatpush1.msra.mxu0 %v297
    %954 = vmatprep.subr.mxu0 0.0
    %955 = vmatpush1.msra.mxu0 %v298
    %956 = vmatprep.subr.mxu0 0.0
    %957 = vmatpush1.msra.mxu0 %v299
    %958 = vmatprep.subr.mxu0 0.0
    %959 = vmatpush1.msra.mxu0 %v300
    %960 = vmatprep.subr.mxu0 0.0
    %961 = vmatpush1.msra.mxu0 %v301
    %962 = vmatprep.subr.mxu0 0.0
    %963 = vmatpush1.msra.mxu0 %v302
    %964 = vmatprep.subr.mxu0 0.0
    %965 = vmatpush1.msra.mxu0 %v303
    %966 = vmatprep.subr.mxu0 0.0
    %967 = vmatpush1.msra.mxu0 %v304
    %968 = vmatprep.subr.mxu0 0.0
    %969 = vmatpush1.msra.mxu0 %v305
    %970 = vmatprep.subr.mxu0 0.0
    %971 = vmatpush1.msra.mxu0 %v306
    %972 = vmatprep.subr.mxu0 0.0
    %973 = vmatpush1.msra.mxu0 %v307
    %974 = vmatprep.subr.mxu0 0.0
    %975 = vmatpush1.msra.mxu0 %v308
    %976 = vmatprep.subr.mxu0 0.0
    %977 = vmatpush1.msra.mxu0 %v309
    %978 = vmatprep.subr.mxu0 0.0
    %979 = vmatpush1.msra.mxu0 %v310
    %980 = vmatprep.subr.mxu0 0.0
    %981 = vmatpush1.msra.mxu0 %v311
    %982 = vmatprep.subr.mxu0 0.0
    %983 = vmatpush1.msra.mxu0 %v312
    %984 = vmatprep.subr.mxu0 0.0
    %985 = vmatpush1.msra.mxu0 %v313
    %986 = vmatprep.subr.mxu0 0.0
    %987 = vmatpush1.msra.mxu0 %v314
    %988 = vmatprep.subr.mxu0 0.0
    %989 = vmatpush1.msra.mxu0 %v315
    %990 = vmatprep.subr.mxu0 0.0
    %991 = vmatpush1.msra.mxu0 %v316
    %992 = vmatprep.subr.mxu0 0.0
    %993 = vmatpush1.msra.mxu0 %v317
    %994 = vmatprep.subr.mxu0 0.0
    %995 = vmatpush1.msra.mxu0 %v318
    %996 = vmatprep.subr.mxu0 0.0
    %997 = vmatpush1.msra.mxu0 %v319
    %998 = vmatprep.subr.mxu0 0.0
    %999 = vmatpush1.msra.mxu0 %v320
    %1000 = vmatprep.subr.mxu0 0.0
    %1001 = vmatpush1.msra.mxu0 %v321
    %1002 = vmatprep.subr.mxu0 0.0
    %1003 = vmatpush1.msra.mxu0 %v322
    %1004 = vmatprep.subr.mxu0 0.0
    %1005 = vmatpush1.msra.mxu0 %v323
    %1006 = vmatprep.mubr.f32.mxu0 %v59
    %1007 = vmatmul.mubr.f32.gmra.mrb[0].mxu0 %v58
    %v1008 = vpop.f32.mrb[0].mxu0
    %v1009 = vadd.f32 %v939, %v1008
    %v1010 = vpop.f32.mrb[0].mxu0
    %1011 = vdwg.mxu0
    %1012 = vmatprep.subr.mxu0 0.0
    %1013 = vmatpush1.msra.mxu0 %v324
    %1014 = vmatprep.subr.mxu0 0.0
    %1015 = vmatpush1.msra.mxu0 %v325
    %1016 = vmatprep.subr.mxu0 0.0
    %1017 = vmatpush1.msra.mxu0 %v326
    %1018 = vmatprep.subr.mxu0 0.0
    %1019 = vmatpush1.msra.mxu0 %v327
    %1020 = vmatprep.subr.mxu0 0.0
    %1021 = vmatpush1.msra.mxu0 %v328
    %1022 = vmatprep.subr.mxu0 0.0
    %1023 = vmatpush1.msra.mxu0 %v329
    %1024 = vmatprep.subr.mxu0 0.0
    %1025 = vmatpush1.msra.mxu0 %v330
    %1026 = vmatprep.subr.mxu0 0.0
    %1027 = vmatpush1.msra.mxu0 %v331
    %1028 = vmatprep.subr.mxu0 0.0
    %1029 = vmatpush1.msra.mxu0 %v332
    %1030 = vmatprep.subr.mxu0 0.0
    %1031 = vmatpush1.msra.mxu0 %v333
    %1032 = vmatprep.subr.mxu0 0.0
    %1033 = vmatpush1.msra.mxu0 %v334
    %1034 = vmatprep.subr.mxu0 0.0
    %1035 = vmatpush1.msra.mxu0 %v335
    %1036 = vmatprep.subr.mxu0 0.0
    %1037 = vmatpush1.msra.mxu0 %v336
    %1038 = vmatprep.subr.mxu0 0.0
    %1039 = vmatpush1.msra.mxu0 %v337
    %1040 = vmatprep.subr.mxu0 0.0
    %1041 = vmatpush1.msra.mxu0 %v338
    %1042 = vmatprep.subr.mxu0 0.0
    %1043 = vmatpush1.msra.mxu0 %v339
    %1044 = vmatprep.subr.mxu0 0.0
    %1045 = vmatpush1.msra.mxu0 %v340
    %1046 = vmatprep.subr.mxu0 0.0
    %1047 = vmatpush1.msra.mxu0 %v341
    %1048 = vmatprep.subr.mxu0 0.0
    %1049 = vmatpush1.msra.mxu0 %v342
    %1050 = vmatprep.subr.mxu0 0.0
    %1051 = vmatpush1.msra.mxu0 %v343
    %1052 = vmatprep.subr.mxu0 0.0
    %1053 = vmatpush1.msra.mxu0 %v344
    %1054 = vmatprep.subr.mxu0 0.0
    %1055 = vmatpush1.msra.mxu0 %v345
    %1056 = vmatprep.subr.mxu0 0.0
    %1057 = vmatpush1.msra.mxu0 %v346
    %1058 = vmatprep.subr.mxu0 0.0
    %1059 = vmatpush1.msra.mxu0 %v347
    %1060 = vmatprep.subr.mxu0 0.0
    %1061 = vmatpush1.msra.mxu0 %v348
    %1062 = vmatprep.subr.mxu0 0.0
    %1063 = vmatpush1.msra.mxu0 %v349
    %1064 = vmatprep.subr.mxu0 0.0
    %1065 = vmatpush1.msra.mxu0 %v350
    %1066 = vmatprep.subr.mxu0 0.0
    %1067 = vmatpush1.msra.mxu0 %v351
    %1068 = vmatprep.subr.mxu0 0.0
    %1069 = vmatpush1.msra.mxu0 %v352
    %1070 = vmatprep.subr.mxu0 0.0
    %1071 = vmatpush1.msra.mxu0 %v353
    %1072 = vmatprep.subr.mxu0 0.0
    %1073 = vmatpush1.msra.mxu0 %v354
    %1074 = vmatprep.subr.mxu0 0.0
    %1075 = vmatpush1.msra.mxu0 %v355
    %1076 = vmatprep.mubr.f32.mxu0 %v61
    %1077 = vmatmul.mubr.f32.gmra.mrb[0].mxu0 %v60
    %v1078 = vpop.f32.mrb[0].mxu0
    %v1079 = vadd.f32 %v1009, %v1078
    %v1080 = vpop.f32.mrb[0].mxu0
    %1081 = vdwg.mxu0
    %1082 = vmatprep.subr.mxu0 0.0
    %1083 = vmatpush1.msra.mxu0 %v356
    %1084 = vmatprep.subr.mxu0 0.0
    %1085 = vmatpush1.msra.mxu0 %v357
    %1086 = vmatprep.subr.mxu0 0.0
    %1087 = vmatpush1.msra.mxu0 %v358
    %1088 = vmatprep.subr.mxu0 0.0
    %1089 = vmatpush1.msra.mxu0 %v359
    %1090 = vmatprep.subr.mxu0 0.0
    %1091 = vmatpush1.msra.mxu0 %v360
    %1092 = vmatprep.subr.mxu0 0.0
    %1093 = vmatpush1.msra.mxu0 %v361
    %1094 = vmatprep.subr.mxu0 0.0
    %1095 = vmatpush1.msra.mxu0 %v362
    %1096 = vmatprep.subr.mxu0 0.0
    %1097 = vmatpush1.msra.mxu0 %v363
    %1098 = vmatprep.subr.mxu0 0.0
    %1099 = vmatpush1.msra.mxu0 %v364
    %1100 = vmatprep.subr.mxu0 0.0
    %1101 = vmatpush1.msra.mxu0 %v365
    %1102 = vmatprep.subr.mxu0 0.0
    %1103 = vmatpush1.msra.mxu0 %v366
    %1104 = vmatprep.subr.mxu0 0.0
    %1105 = vmatpush1.msra.mxu0 %v367
    %1106 = vmatprep.subr.mxu0 0.0
    %1107 = vmatpush1.msra.mxu0 %v368
    %1108 = vmatprep.subr.mxu0 0.0
    %1109 = vmatpush1.msra.mxu0 %v369
    %1110 = vmatprep.subr.mxu0 0.0
    %1111 = vmatpush1.msra.mxu0 %v370
    %1112 = vmatprep.subr.mxu0 0.0
    %1113 = vmatpush1.msra.mxu0 %v371
    %1114 = vmatprep.subr.mxu0 0.0
    %1115 = vmatpush1.msra.mxu0 %v372
    %1116 = vmatprep.subr.mxu0 0.0
    %1117 = vmatpush1.msra.mxu0 %v373
    %1118 = vmatprep.subr.mxu0 0.0
    %1119 = vmatpush1.msra.mxu0 %v374
    %1120 = vmatprep.subr.mxu0 0.0
    %1121 = vmatpush1.msra.mxu0 %v375
    %1122 = vmatprep.subr.mxu0 0.0
    %1123 = vmatpush1.msra.mxu0 %v376
    %1124 = vmatprep.subr.mxu0 0.0
    %1125 = vmatpush1.msra.mxu0 %v377
    %1126 = vmatprep.subr.mxu0 0.0
    %1127 = vmatpush1.msra.mxu0 %v378
    %1128 = vmatprep.subr.mxu0 0.0
    %1129 = vmatpush1.msra.mxu0 %v379
    %1130 = vmatprep.subr.mxu0 0.0
    %1131 = vmatpush1.msra.mxu0 %v380
    %1132 = vmatprep.subr.mxu0 0.0
    %1133 = vmatpush1.msra.mxu0 %v381
    %1134 = vmatprep.subr.mxu0 0.0
    %1135 = vmatpush1.msra.mxu0 %v382
    %1136 = vmatprep.subr.mxu0 0.0
    %1137 = vmatpush1.msra.mxu0 %v383
    %1138 = vmatprep.subr.mxu0 0.0
    %1139 = vmatpush1.msra.mxu0 %v384
    %1140 = vmatprep.subr.mxu0 0.0
    %1141 = vmatpush1.msra.mxu0 %v385
    %1142 = vmatprep.subr.mxu0 0.0
    %1143 = vmatpush1.msra.mxu0 %v386
    %1144 = vmatprep.subr.mxu0 0.0
    %1145 = vmatpush1.msra.mxu0 %v387
    %1146 = vmatprep.mubr.f32.mxu0 %v63
    %1147 = vmatmul.mubr.f32.gmra.mrb[0].mxu0 %v62
    %v1148 = vpop.f32.mrb[0].mxu0
    %v1149 = vadd.f32 %v1079, %v1148
    %v1150 = vpop.f32.mrb[0].mxu0
    %1151 = vdwg.mxu0
    %1152 = vmatprep.subr.mxu0 0.0
    %1153 = vmatpush1.msra.mxu0 %v388
    %1154 = vmatprep.subr.mxu0 0.0
    %1155 = vmatpush1.msra.mxu0 %v389
    %1156 = vmatprep.subr.mxu0 0.0
    %1157 = vmatpush1.msra.mxu0 %v390
    %1158 = vmatprep.subr.mxu0 0.0
    %1159 = vmatpush1.msra.mxu0 %v391
    %1160 = vmatprep.subr.mxu0 0.0
    %1161 = vmatpush1.msra.mxu0 %v392
    %1162 = vmatprep.subr.mxu0 0.0
    %1163 = vmatpush1.msra.mxu0 %v393
    %1164 = vmatprep.subr.mxu0 0.0
    %1165 = vmatpush1.msra.mxu0 %v394
    %1166 = vmatprep.subr.mxu0 0.0
    %1167 = vmatpush1.msra.mxu0 %v395
    %1168 = vmatprep.subr.mxu0 0.0
    %1169 = vmatpush1.msra.mxu0 %v396
    %1170 = vmatprep.subr.mxu0 0.0
    %1171 = vmatpush1.msra.mxu0 %v397
    %1172 = vmatprep.subr.mxu0 0.0
    %1173 = vmatpush1.msra.mxu0 %v398
    %1174 = vmatprep.subr.mxu0 0.0
    %1175 = vmatpush1.msra.mxu0 %v399
    %1176 = vmatprep.subr.mxu0 0.0
    %1177 = vmatpush1.msra.mxu0 %v400
    %1178 = vmatprep.subr.mxu0 0.0
    %1179 = vmatpush1.msra.mxu0 %v401
    %1180 = vmatprep.subr.mxu0 0.0
    %1181 = vmatpush1.msra.mxu0 %v402
    %1182 = vmatprep.subr.mxu0 0.0
    %1183 = vmatpush1.msra.mxu0 %v403
    %1184 = vmatprep.subr.mxu0 0.0
    %1185 = vmatpush1.msra.mxu0 %v404
    %1186 = vmatprep.subr.mxu0 0.0
    %1187 = vmatpush1.msra.mxu0 %v405
    %1188 = vmatprep.subr.mxu0 0.0
    %1189 = vmatpush1.msra.mxu0 %v406
    %1190 = vmatprep.subr.mxu0 0.0
    %1191 = vmatpush1.msra.mxu0 %v407
    %1192 = vmatprep.subr.mxu0 0.0
    %1193 = vmatpush1.msra.mxu0 %v408
    %1194 = vmatprep.subr.mxu0 0.0
    %1195 = vmatpush1.msra.mxu0 %v409
    %1196 = vmatprep.subr.mxu0 0.0
    %1197 = vmatpush1.msra.mxu0 %v410
    %1198 = vmatprep.subr.mxu0 0.0
    %1199 = vmatpush1.msra.mxu0 %v411
    %1200 = vmatprep.subr.mxu0 0.0
    %1201 = vmatpush1.msra.mxu0 %v412
    %1202 = vmatprep.subr.mxu0 0.0
    %1203 = vmatpush1.msra.mxu0 %v413
    %1204 = vmatprep.subr.mxu0 0.0
    %1205 = vmatpush1.msra.mxu0 %v414
    %1206 = vmatprep.subr.mxu0 0.0
    %1207 = vmatpush1.msra.mxu0 %v415
    %1208 = vmatprep.subr.mxu0 0.0
    %1209 = vmatpush1.msra.mxu0 %v416
    %1210 = vmatprep.subr.mxu0 0.0
    %1211 = vmatpush1.msra.mxu0 %v417
    %1212 = vmatprep.subr.mxu0 0.0
    %1213 = vmatpush1.msra.mxu0 %v418
    %1214 = vmatprep.subr.mxu0 0.0
    %1215 = vmatpush1.msra.mxu0 %v419
    %1216 = vmatprep.mubr.f32.mxu0 %v65
    %1217 = vmatmul.mubr.f32.gmra.mrb[0].mxu0 %v64
    %v1218 = vpop.f32.mrb[0].mxu0
    %v1219 = vadd.f32 %v1149, %v1218
    %v1220 = vpop.f32.mrb[0].mxu0
    %1221 = vdwg.mxu0
    %1222 = vmatprep.subr.mxu0 0.0
    %1223 = vmatpush1.msra.mxu0 %v420
    %1224 = vmatprep.subr.mxu0 0.0
    %1225 = vmatpush1.msra.mxu0 %v421
    %1226 = vmatprep.subr.mxu0 0.0
    %1227 = vmatpush1.msra.mxu0 %v422
    %1228 = vmatprep.subr.mxu0 0.0
    %1229 = vmatpush1.msra.mxu0 %v423
    %1230 = vmatprep.subr.mxu0 0.0
    %1231 = vmatpush1.msra.mxu0 %v424
    %1232 = vmatprep.subr.mxu0 0.0
    %1233 = vmatpush1.msra.mxu0 %v425
    %1234 = vmatprep.subr.mxu0 0.0
    %1235 = vmatpush1.msra.mxu0 %v426
    %1236 = vmatprep.subr.mxu0 0.0
    %1237 = vmatpush1.msra.mxu0 %v427
    %1238 = vmatprep.subr.mxu0 0.0
    %1239 = vmatpush1.msra.mxu0 %v428
    %1240 = vmatprep.subr.mxu0 0.0
    %1241 = vmatpush1.msra.mxu0 %v429
    %1242 = vmatprep.subr.mxu0 0.0
    %1243 = vmatpush1.msra.mxu0 %v430
    %1244 = vmatprep.subr.mxu0 0.0
    %1245 = vmatpush1.msra.mxu0 %v431
    %1246 = vmatprep.subr.mxu0 0.0
    %1247 = vmatpush1.msra.mxu0 %v432
    %1248 = vmatprep.subr.mxu0 0.0
    %1249 = vmatpush1.msra.mxu0 %v433
    %1250 = vmatprep.subr.mxu0 0.0
    %1251 = vmatpush1.msra.mxu0 %v434
    %1252 = vmatprep.subr.mxu0 0.0
    %1253 = vmatpush1.msra.mxu0 %v435
    %1254 = vmatprep.subr.mxu0 0.0
    %1255 = vmatpush1.msra.mxu0 %v436
    %1256 = vmatprep.subr.mxu0 0.0
    %1257 = vmatpush1.msra.mxu0 %v437
    %1258 = vmatprep.subr.mxu0 0.0
    %1259 = vmatpush1.msra.mxu0 %v438
    %1260 = vmatprep.subr.mxu0 0.0
    %1261 = vmatpush1.msra.mxu0 %v439
    %1262 = vmatprep.subr.mxu0 0.0
    %1263 = vmatpush1.msra.mxu0 %v440
    %1264 = vmatprep.subr.mxu0 0.0
    %1265 = vmatpush1.msra.mxu0 %v441
    %1266 = vmatprep.subr.mxu0 0.0
    %1267 = vmatpush1.msra.mxu0 %v442
    %1268 = vmatprep.subr.mxu0 0.0
    %1269 = vmatpush1.msra.mxu0 %v443
    %1270 = vmatprep.subr.mxu0 0.0
    %1271 = vmatpush1.msra.mxu0 %v444
    %1272 = vmatprep.subr.mxu0 0.0
    %1273 = vmatpush1.msra.mxu0 %v445
    %1274 = vmatprep.subr.mxu0 0.0
    %1275 = vmatpush1.msra.mxu0 %v446
    %1276 = vmatprep.subr.mxu0 0.0
    %1277 = vmatpush1.msra.mxu0 %v447
    %1278 = vmatprep.subr.mxu0 0.0
    %1279 = vmatpush1.msra.mxu0 %v448
    %1280 = vmatprep.subr.mxu0 0.0
    %1281 = vmatpush1.msra.mxu0 %v449
    %1282 = vmatprep.subr.mxu0 0.0
    %1283 = vmatpush1.msra.mxu0 %v450
    %1284 = vmatprep.subr.mxu0 0.0
    %1285 = vmatpush1.msra.mxu0 %v451
    %1286 = vmatprep.mubr.f32.mxu0 %v67
    %1287 = vmatmul.mubr.f32.gmra.mrb[0].mxu0 %v66
    %v1288 = vpop.f32.mrb[0].mxu0
    %v1289 = vadd.f32 %v1219, %v1288
    %v1290 = vpop.f32.mrb[0].mxu0
    %1291 = vdwg.mxu0
    %v1292 = vadd.f32 %v43, %v1289
    %1293 = vst [vmem:[#allocation2] sm:$0xff] %v1292
    // Predicated region
    $region22: #{tpu_custom_call.1} parent=1 // pred_check
      %p1294 = pneg %p38
    $region23: #{tpu_custom_call.1} parent=1 // pred_check_branch
      %1296 = sbr.rel (%p1294) target = $region25
    $region24: #{tpu_custom_call.1} parent=1 // pred_region
      %v1297 = vld [vmem:[#allocation2] sm:$0xff]
      %v1299 = vcombine.high %v1297, %v1297
      %v1301 = vmul.f32 %v1297, %v1297
      %v1302 = vmul.f32 %v1299, %v1299
      %vm1303 = vcmask 1043456
      %v1304 = vsel %vm1303, %v1301, 0.0
      %1305 = vadd.xlane.f32.xlu0 %v1304
      %v1306 = vpop.xlane.xlu0 %1305
      %v1307 = vsel %vm1303, %v1302, 0.0
      %1308 = vadd.xlane.f32.xlu0 %v1307
      %v1309 = vpop.xlane.xlu0 %1308
      %v1310 = vmax.f32 %v1306, 1e-24
      %v1311 = vmax.f32 %v1309, 1e-24
      %v1312 = vrsqrt.pop %v1310
      %v1313 = vrsqrt.pop %v1311
      %v1314 = vmul.f32 %v1297, %v1312
      %v1315 = vmul.f32 %v1299, %v1313
      %v1316 = vsel %vm1303, %v1314, 0.0
      %v1317 = vrot.slane %v1316, 4
      %v1318 = vadd.f32 %v1316, %v1317
      %v1319 = vrot.slane %v1318, 2
      %v1320 = vadd.f32 %v1318, %v1319
      %v1321 = vrot.slane %v1320, 1
      %v1322 = vadd.f32 %v1320, %v1321
      %v1323 = vsel %vm1303, %v1315, 0.0
      %v1324 = vrot.slane %v1323, 4
      %v1325 = vadd.f32 %v1323, %v1324
      %v1326 = vrot.slane %v1325, 2
      %v1327 = vadd.f32 %v1325, %v1326
      %v1328 = vrot.slane %v1327, 1
      %v1329 = vadd.f32 %v1327, %v1328
      %vm1332 = vcmask 1041409
      %v1333 = vsel %vm1332, %v1329, %v1322
      %1335 = vst [vmem:[#allocation8] sm:$0x3] %v1333
    $region25: #{tpu_custom_call.1} parent=1 // pred_fallthru
      _
    // Predicated region
    $region26: #{tpu_custom_call.1} parent=1 // pred_check
      _
    $region27: #{tpu_custom_call.1} parent=1 // pred_check_branch
      %1337 = sbr.rel (0) target = $region29
    $region28: #{tpu_custom_call.1} parent=1 // pred_region
      %s1339 = ssub.s32 32, 32
      %1340 = vsyncadd [#allocation5], %s1339
      %s1342 = sshll.u32 [#allocation8], 4
      %s1343 = int_to_ptr.vmem [resolvable:$true] %s1342
      %1345 = dma.vmem_to_hbm [thread:$0]  %s1343, 32, %s2, [#allocation5]
    $region29: #{tpu_custom_call.1} parent=1 // pred_fallthru
      _
    // Predicated region
    $region30: #{tpu_custom_call.1} parent=1 // pred_check
      _
    $region31: #{tpu_custom_call.1} parent=1 // pred_check_branch
      %1347 = sbr.rel (0) target = $region33
    $region32: #{tpu_custom_call.1} parent=1 // pred_region
      %1348 = dma.done [#allocation5], 32
    $region33: #{tpu_custom_call.1} parent=1 // pred_fallthru
      _
    %1349 = vsyncpa [#allocation4], 1
    %1350 = vsyncpa [#allocation7], 1
    %1351 = vsyncpa [#allocation5], 1

</llo_original>
